<compile_context>
chip_gen: v7x
topology: tpu7x:2x2x1
jax: 0.10.0
libtpu: 0.0.40
codegen_flags: <defaults>
</compile_context>

<pallas_src>
import functools

import jax
import jax.numpy as jnp
from jax import lax
from jax.experimental import pallas as pl
from jax.experimental.pallas import tpu as pltpu


_VMEM_LIMIT_BYTES = 64 * 1024 * 1024   # <= physical on every generation
_VMEM_BUDGET_BYTES = 40 * 1024 * 1024  # tile-sizing budget (leaves headroom)


def _round_up(x, m):
    return ((x + m - 1) // m) * m


def _downsample_conv_kernel(ph_ref, w_ref, b_ref, o_ref, *, wph):
    """3x3 / stride-2 conv on one (image, output-row tile): 9 MXU dots.

    ph_ref: (1, 4, 1, Rblk, C)   phase-decomposed, flattened, halo'd row tile
    w_ref:  (9, C, Np)           per-tap weights, out-dim padded to 128
    b_ref:  (1, Np)              bias (f32)
    o_ref:  (1, 1, Mtile, Np)    output slab (compute dtype), lane-dense

    Valid outputs live at slab-local index r*wph + q (q < Wo); other rows are
    padding/garbage and are sliced off by the wrapper.  For every tap (kh,kw)
    the needed window of phase p = 2*(kh%2)+(kw%2) is a contiguous slab
    starting at the static offset (kh//2)*wph + (kw//2), so the 9 dots simply
    accumulate into one f32 register tile.
    """
    mtile = o_ref.shape[2]
    npad = o_ref.shape[3]
    # bias-initialised accumulator (hoisted broadcast, no epilogue add)
    acc = jnp.broadcast_to(b_ref[...], (mtile, npad)).astype(jnp.float32)
    for kh in range(3):
        for kw in range(3):
            p = 2 * (kh % 2) + (kw % 2)          # parity phase
            off = (kh // 2) * wph + (kw // 2)    # static slab offset
            lhs = ph_ref[0, p, 0, off:off + mtile, :]        # (mtile, cin)
            acc = acc + jnp.dot(lhs, w_ref[3 * kh + kw],
                                preferred_element_type=jnp.float32)
    o_ref[0, 0] = acc.astype(o_ref.dtype)


@functools.partial(jax.jit, static_argnames=("compute_dtype", "tile_rows"))
def downsample_avg_conv(x_nchw, weight, bias, *, compute_dtype=jnp.bfloat16,
                        tile_rows=None):
    """3x3 stride-2 pad-1 conv, channels->channels (nn.Conv2d semantics).

    x_nchw: [B, C, H, W]   (PyTorch NCHW convention)
    weight: [C, C, 3, 3]   (PyTorch Conv2d layout: [out, in, kh, kw])
    bias:   [C]
    returns [B, C, Ho, Wo] in x's dtype, Ho = (H+2-3)//2 + 1, Wo analogous.
    """
    B, C, H, W = x_nchw.shape
    Ho = (H - 1) // 2 + 1
    Wo = (W - 1) // 2 + 1
    Hph = Ho + 1                        # phase rows holding real data
    Wq = Wo + 1                         # phase cols holding real data

    in_isz = jnp.dtype(compute_dtype).itemsize
    out_isz = in_isz                    # kernel emits compute dtype
    sub = 32 // in_isz                  # sublane tile: 8 (f32) / 16 (bf16)
    Wph = _round_up(Wq, sub)            # aligned phase width
    Np = _round_up(C, 128)              # lane-dense out channels

    # ---- output-row tile size: bound per-step VMEM independent of H, W ----
    def tile_bytes(tr):
        return (2 * 4 * (tr + 2) * Wph * C * in_isz     # 2x phase block
                + 2 * tr * Wph * Np * out_isz)          # 2x output block
    weight_bytes = 2 * 9 * C * Np * in_isz + 2 * Np * 4
    budget = _VMEM_BUDGET_BYTES - weight_bytes
    if tile_rows is not None:
        TR = max(1, min(int(tile_rows), Ho))
    else:
        TR = Ho
        while TR > 1 and tile_bytes(TR) > budget:
            TR = (TR + 1) // 2
    NT = -(-Ho // TR)                   # number of row tiles
    Ho_pad = NT * TR
    Mtile = TR * Wph                    # output slab rows per grid step
    Rblk = (TR + 2) * Wph               # phase rows per step (tile + halo)

    # ---- glue: compute-dtype cast + NHWC + zero-pad + parity-phase split ----
    x = jnp.transpose(x_nchw, (0, 2, 3, 1)).astype(compute_dtype)   # [B,H,W,C]
    x_pad = jnp.pad(
        x, ((0, 0), (1, 2 * Hph - H - 1), (1, 2 * Wq - W - 1), (0, 0)))
    # phase(i,j)[r,q,c] = x_pad[2r+i, 2q+j, c],  p = 2*i + j
    ph = x_pad.reshape(B, Hph, 2, Wq, 2, C)
    ph = jnp.transpose(ph, (0, 2, 4, 1, 3, 5)).reshape(B, 4, Hph, Wq, C)
    Hrows = Ho_pad + 2
    ph = jnp.pad(ph, ((0, 0), (0, 0), (0, Hrows - Hph), (0, Wph - Wq), (0, 0)))

    # per-tile blocks with a 2-phase-row halo (static slices only, no gather)
    main = ph[:, :, :Ho_pad].reshape(B, 4, NT, TR, Wph, C)
    h0 = ph[:, :, TR::TR][:, :, :NT]          # phase row (t+1)*TR
    h1 = ph[:, :, TR + 1::TR][:, :, :NT]      # phase row (t+1)*TR + 1
    tiles = jnp.concatenate([main, h0[:, :, :, None], h1[:, :, :, None]],
                            axis=3)
    tiles = tiles.reshape(B, 4, NT, Rblk, C)

    # weights: [cout, cin, kh, kw] -> (tap, cin, cout), cout padded to Np
    w_taps = jnp.transpose(weight, (2, 3, 1, 0)).reshape(9, C, C)
    w_taps = jnp.pad(w_taps, ((0, 0), (0, 0), (0, Np - C))).astype(compute_dtype)
    b_row = jnp.pad(bias, (0, Np - C)).reshape(1, Np).astype(jnp.float32)

    cost = pl.CostEstimate(
        flops=2 * B * NT * 9 * Mtile * C * Np,
        transcendentals=0,
        bytes_accessed=(tiles.size * in_isz + w_taps.size * in_isz
                        + b_row.size * 4 + B * NT * Mtile * Np * out_isz),
    )

    out = pl.pallas_call(
        functools.partial(_downsample_conv_kernel, wph=Wph),
        out_shape=jax.ShapeDtypeStruct((B, NT, Mtile, Np), compute_dtype),
        grid_spec=pltpu.PrefetchScalarGridSpec(
            num_scalar_prefetch=0,
            grid=(B, NT),
            in_specs=[
                # per-(image, row-tile) phase slab
                pl.BlockSpec((1, 4, 1, Rblk, C), lambda b, t: (b, 0, t, 0, 0)),
                # weights / bias: constant index -> fetched once, stay resident
                pl.BlockSpec((9, C, Np), lambda b, t: (0, 0, 0)),
                pl.BlockSpec((1, Np), lambda b, t: (0, 0)),
            ],
            out_specs=pl.BlockSpec((1, 1, Mtile, Np), lambda b, t: (b, t, 0, 0)),
        ),
        compiler_params=pltpu.CompilerParams(
            dimension_semantics=("parallel", "parallel"),
            vmem_limit_bytes=_VMEM_LIMIT_BYTES,
        ),
        cost_estimate=cost,
    )(tiles, w_taps, b_row)

    # drop lane / slab / row padding, back to NCHW in the caller's dtype
    out = out.reshape(B, Ho_pad, Wph, Np)[:, :Ho, :Wo, :C]
    return jnp.transpose(out, (0, 3, 1, 2)).astype(x_nchw.dtype)


if __name__ == "__main__":
    key = jax.random.PRNGKey(0)

    def ref_conv(x, w, b):
        y = lax.conv_general_dilated(
            x, w, window_strides=(2, 2), padding=((1, 1), (1, 1)),
            dimension_numbers=("NCHW", "OIHW", "NCHW"))
        return y + b.reshape(1, -1, 1, 1)

    def make_case(k, B, C, H, W):
        k_x, k_w, k_b = jax.random.split(k, 3)
        x = jax.random.normal(k_x, (B, C, H, W), dtype=jnp.float32)
        fan_in = C * 3 * 3
        w = jax.random.normal(k_w, (C, C, 3, 3), dtype=jnp.float32) / jnp.sqrt(fan_in)
        b = jax.random.normal(k_b, (C,), dtype=jnp.float32) * 0.1
        return x, w, b

    k1, k2 = jax.random.split(key)
    cases = [("even 16x16", make_case(k1, 2, 4, 16, 16)),
             ("odd 13x15", make_case(k2, 1, 4, 13, 15))]

    for name, (x, w, b) in cases:
        B, C, H, W = x.shape
        Ho, Wo = (H - 1) // 2 + 1, (W - 1) // 2 + 1
        y_ref = ref_conv(x, w, b)

        # exact-algorithm check (f32 operands, f32 accumulation)
        y32 = jax.block_until_ready(
            downsample_avg_conv(x, w, b, compute_dtype=jnp.float32))
        assert y32.shape == (B, C, Ho, Wo), (name, y32.shape)
        assert jnp.allclose(y32, y_ref, atol=1e-4, rtol=1e-4), f"f32 mismatch ({name})"

        # fast path: bf16 operands + bf16 kernel output, f32 MXU accumulation
        y16 = jax.block_until_ready(downsample_avg_conv(x, w, b))
        assert y16.shape == (B, C, Ho, Wo), (name, y16.shape)
        assert jnp.allclose(y16, y_ref, atol=5e-2, rtol=5e-2), f"bf16 mismatch ({name})"

        # multi-tile spatial grid (NT > 1): exercises the halo'd row tiling
        y_tiled = jax.block_until_ready(
            downsample_avg_conv(x, w, b, compute_dtype=jnp.float32, tile_rows=3))
        assert jnp.allclose(y_tiled, y_ref, atol=1e-4, rtol=1e-4), \
            f"tiled f32 mismatch ({name})"

    print("KERNEL_OK")
</pallas_src>

<mosaic_0001>
module attributes {stable_mosaic.version = 11 : i64} {
  func.func @_downsample_conv_kernel(%arg0: i32, %arg1: i32, %arg2: memref<1x4x1x160x4xf32, #tpu.memory_space<vmem>>, %arg3: memref<9x4x128xf32, #tpu.memory_space<vmem>>, %arg4: memref<1x128xf32, #tpu.memory_space<vmem>>, %arg5: memref<1x1x128x128xf32, #tpu.memory_space<vmem>>) attributes {dimension_semantics = [#tpu.dimension_semantics<parallel>, #tpu.dimension_semantics<parallel>], iteration_bounds = array<i64: 2, 1>, scalar_prefetch = 0 : i64, scratch_operands = 0 : i64, tpu.core_type = #tpu.core_type<tc>, window_params = [{transform_indices = @transform_0, window_bounds = array<i64: 1, 4, 1, 160, 4>}, {pipeline_mode = #tpu.pipeline_mode<synchronous>, transform_indices = @transform_1, window_bounds = array<i64: 9, 4, 128>}, {pipeline_mode = #tpu.pipeline_mode<synchronous>, transform_indices = @transform_2, window_bounds = array<i64: 1, 128>}, {transform_indices = @transform_3, window_bounds = array<i64: 1, 1, 128, 128>}]} {
    %c0 = arith.constant 0 : index
    %c0_0 = arith.constant 0 : index
    %0 = vector.load %arg4[%c0, %c0_0] : memref<1x128xf32, #tpu.memory_space<vmem>>, vector<1x128xf32>
    %1 = vector.shape_cast %0 : vector<1x128xf32> to vector<1x128xf32>
    %2 = vector.broadcast %1 : vector<1x128xf32> to vector<128x128xf32>
    %c0_1 = arith.constant 0 : index
    %c0_2 = arith.constant 0 : index
    %c0_3 = arith.constant 0 : index
    %c0_4 = arith.constant 0 : index
    %c0_5 = arith.constant 0 : index
    %3 = vector.load %arg2[%c0_1, %c0_2, %c0_3, %c0_4, %c0_5] : memref<1x4x1x160x4xf32, #tpu.memory_space<vmem>>, vector<1x1x1x128x4xf32>
    %4 = vector.shape_cast %3 : vector<1x1x1x128x4xf32> to vector<128x4xf32>
    %c0_6 = arith.constant 0 : index
    %c0_7 = arith.constant 0 : index
    %c0_8 = arith.constant 0 : index
    %5 = vector.load %arg3[%c0_6, %c0_7, %c0_8] : memref<9x4x128xf32, #tpu.memory_space<vmem>>, vector<1x4x128xf32>
    %6 = vector.shape_cast %5 : vector<1x4x128xf32> to vector<4x128xf32>
    %cst = arith.constant dense<0.000000e+00> : vector<128x128xf32>
    %7 = tpu.matmul %4, %6, %cst {dimension_numbers = #tpu.dot_dimension_numbers<[1], [0], [0], [1], [0, 0, 1, 1], [], []>} : vector<128x4xf32>, vector<4x128xf32>, vector<128x128xf32> -> vector<128x128xf32>
    %8 = arith.addf %2, %7 : vector<128x128xf32>
    %c0_9 = arith.constant 0 : index
    %c1 = arith.constant 1 : index
    %c0_10 = arith.constant 0 : index
    %c0_11 = arith.constant 0 : index
    %c0_12 = arith.constant 0 : index
    %9 = vector.load %arg2[%c0_9, %c1, %c0_10, %c0_11, %c0_12] : memref<1x4x1x160x4xf32, #tpu.memory_space<vmem>>, vector<1x1x1x128x4xf32>
    %10 = vector.shape_cast %9 : vector<1x1x1x128x4xf32> to vector<128x4xf32>
    %c1_13 = arith.constant 1 : index
    %c0_14 = arith.constant 0 : index
    %c0_15 = arith.constant 0 : index
    %11 = vector.load %arg3[%c1_13, %c0_14, %c0_15] : memref<9x4x128xf32, #tpu.memory_space<vmem>>, vector<1x4x128xf32>
    %12 = vector.shape_cast %11 : vector<1x4x128xf32> to vector<4x128xf32>
    %cst_16 = arith.constant dense<0.000000e+00> : vector<128x128xf32>
    %13 = tpu.matmul %10, %12, %cst_16 {dimension_numbers = #tpu.dot_dimension_numbers<[1], [0], [0], [1], [0, 0, 1, 1], [], []>} : vector<128x4xf32>, vector<4x128xf32>, vector<128x128xf32> -> vector<128x128xf32>
    %14 = arith.addf %8, %13 : vector<128x128xf32>
    %c0_17 = arith.constant 0 : index
    %c0_18 = arith.constant 0 : index
    %c0_19 = arith.constant 0 : index
    %c1_20 = arith.constant 1 : index
    %c0_21 = arith.constant 0 : index
    %15 = vector.load %arg2[%c0_17, %c0_18, %c0_19, %c1_20, %c0_21] : memref<1x4x1x160x4xf32, #tpu.memory_space<vmem>>, vector<1x1x1x128x4xf32>
    %16 = vector.shape_cast %15 : vector<1x1x1x128x4xf32> to vector<128x4xf32>
    %c2 = arith.constant 2 : index
    %c0_22 = arith.constant 0 : index
    %c0_23 = arith.constant 0 : index
    %17 = vector.load %arg3[%c2, %c0_22, %c0_23] : memref<9x4x128xf32, #tpu.memory_space<vmem>>, vector<1x4x128xf32>
    %18 = vector.shape_cast %17 : vector<1x4x128xf32> to vector<4x128xf32>
    %cst_24 = arith.constant dense<0.000000e+00> : vector<128x128xf32>
    %19 = tpu.matmul %16, %18, %cst_24 {dimension_numbers = #tpu.dot_dimension_numbers<[1], [0], [0], [1], [0, 0, 1, 1], [], []>} : vector<128x4xf32>, vector<4x128xf32>, vector<128x128xf32> -> vector<128x128xf32>
    %20 = arith.addf %14, %19 : vector<128x128xf32>
    %c0_25 = arith.constant 0 : index
    %c2_26 = arith.constant 2 : index
    %c0_27 = arith.constant 0 : index
    %c0_28 = arith.constant 0 : index
    %c0_29 = arith.constant 0 : index
    %21 = vector.load %arg2[%c0_25, %c2_26, %c0_27, %c0_28, %c0_29] : memref<1x4x1x160x4xf32, #tpu.memory_space<vmem>>, vector<1x1x1x128x4xf32>
    %22 = vector.shape_cast %21 : vector<1x1x1x128x4xf32> to vector<128x4xf32>
    %c3 = arith.constant 3 : index
    %c0_30 = arith.constant 0 : index
    %c0_31 = arith.constant 0 : index
    %23 = vector.load %arg3[%c3, %c0_30, %c0_31] : memref<9x4x128xf32, #tpu.memory_space<vmem>>, vector<1x4x128xf32>
    %24 = vector.shape_cast %23 : vector<1x4x128xf32> to vector<4x128xf32>
    %cst_32 = arith.constant dense<0.000000e+00> : vector<128x128xf32>
    %25 = tpu.matmul %22, %24, %cst_32 {dimension_numbers = #tpu.dot_dimension_numbers<[1], [0], [0], [1], [0, 0, 1, 1], [], []>} : vector<128x4xf32>, vector<4x128xf32>, vector<128x128xf32> -> vector<128x128xf32>
    %26 = arith.addf %20, %25 : vector<128x128xf32>
    %c0_33 = arith.constant 0 : index
    %c3_34 = arith.constant 3 : index
    %c0_35 = arith.constant 0 : index
    %c0_36 = arith.constant 0 : index
    %c0_37 = arith.constant 0 : index
    %27 = vector.load %arg2[%c0_33, %c3_34, %c0_35, %c0_36, %c0_37] : memref<1x4x1x160x4xf32, #tpu.memory_space<vmem>>, vector<1x1x1x128x4xf32>
    %28 = vector.shape_cast %27 : vector<1x1x1x128x4xf32> to vector<128x4xf32>
    %c4 = arith.constant 4 : index
    %c0_38 = arith.constant 0 : index
    %c0_39 = arith.constant 0 : index
    %29 = vector.load %arg3[%c4, %c0_38, %c0_39] : memref<9x4x128xf32, #tpu.memory_space<vmem>>, vector<1x4x128xf32>
    %30 = vector.shape_cast %29 : vector<1x4x128xf32> to vector<4x128xf32>
    %cst_40 = arith.constant dense<0.000000e+00> : vector<128x128xf32>
    %31 = tpu.matmul %28, %30, %cst_40 {dimension_numbers = #tpu.dot_dimension_numbers<[1], [0], [0], [1], [0, 0, 1, 1], [], []>} : vector<128x4xf32>, vector<4x128xf32>, vector<128x128xf32> -> vector<128x128xf32>
    %32 = arith.addf %26, %31 : vector<128x128xf32>
    %c0_41 = arith.constant 0 : index
    %c2_42 = arith.constant 2 : index
    %c0_43 = arith.constant 0 : index
    %c1_44 = arith.constant 1 : index
    %c0_45 = arith.constant 0 : index
    %33 = vector.load %arg2[%c0_41, %c2_42, %c0_43, %c1_44, %c0_45] : memref<1x4x1x160x4xf32, #tpu.memory_space<vmem>>, vector<1x1x1x128x4xf32>
    %34 = vector.shape_cast %33 : vector<1x1x1x128x4xf32> to vector<128x4xf32>
    %c5 = arith.constant 5 : index
    %c0_46 = arith.constant 0 : index
    %c0_47 = arith.constant 0 : index
    %35 = vector.load %arg3[%c5, %c0_46, %c0_47] : memref<9x4x128xf32, #tpu.memory_space<vmem>>, vector<1x4x128xf32>
    %36 = vector.shape_cast %35 : vector<1x4x128xf32> to vector<4x128xf32>
    %cst_48 = arith.constant dense<0.000000e+00> : vector<128x128xf32>
    %37 = tpu.matmul %34, %36, %cst_48 {dimension_numbers = #tpu.dot_dimension_numbers<[1], [0], [0], [1], [0, 0, 1, 1], [], []>} : vector<128x4xf32>, vector<4x128xf32>, vector<128x128xf32> -> vector<128x128xf32>
    %38 = arith.addf %32, %37 : vector<128x128xf32>
    %c0_49 = arith.constant 0 : index
    %c0_50 = arith.constant 0 : index
    %c0_51 = arith.constant 0 : index
    %c16 = arith.constant 16 : index
    %c0_52 = arith.constant 0 : index
    %39 = vector.load %arg2[%c0_49, %c0_50, %c0_51, %c16, %c0_52] : memref<1x4x1x160x4xf32, #tpu.memory_space<vmem>>, vector<1x1x1x128x4xf32>
    %40 = vector.shape_cast %39 : vector<1x1x1x128x4xf32> to vector<128x4xf32>
    %c6 = arith.constant 6 : index
    %c0_53 = arith.constant 0 : index
    %c0_54 = arith.constant 0 : index
    %41 = vector.load %arg3[%c6, %c0_53, %c0_54] : memref<9x4x128xf32, #tpu.memory_space<vmem>>, vector<1x4x128xf32>
    %42 = vector.shape_cast %41 : vector<1x4x128xf32> to vector<4x128xf32>
    %cst_55 = arith.constant dense<0.000000e+00> : vector<128x128xf32>
    %43 = tpu.matmul %40, %42, %cst_55 {dimension_numbers = #tpu.dot_dimension_numbers<[1], [0], [0], [1], [0, 0, 1, 1], [], []>} : vector<128x4xf32>, vector<4x128xf32>, vector<128x128xf32> -> vector<128x128xf32>
    %44 = arith.addf %38, %43 : vector<128x128xf32>
    %c0_56 = arith.constant 0 : index
    %c1_57 = arith.constant 1 : index
    %c0_58 = arith.constant 0 : index
    %c16_59 = arith.constant 16 : index
    %c0_60 = arith.constant 0 : index
    %45 = vector.load %arg2[%c0_56, %c1_57, %c0_58, %c16_59, %c0_60] : memref<1x4x1x160x4xf32, #tpu.memory_space<vmem>>, vector<1x1x1x128x4xf32>
    %46 = vector.shape_cast %45 : vector<1x1x1x128x4xf32> to vector<128x4xf32>
    %c7 = arith.constant 7 : index
    %c0_61 = arith.constant 0 : index
    %c0_62 = arith.constant 0 : index
    %47 = vector.load %arg3[%c7, %c0_61, %c0_62] : memref<9x4x128xf32, #tpu.memory_space<vmem>>, vector<1x4x128xf32>
    %48 = vector.shape_cast %47 : vector<1x4x128xf32> to vector<4x128xf32>
    %cst_63 = arith.constant dense<0.000000e+00> : vector<128x128xf32>
    %49 = tpu.matmul %46, %48, %cst_63 {dimension_numbers = #tpu.dot_dimension_numbers<[1], [0], [0], [1], [0, 0, 1, 1], [], []>} : vector<128x4xf32>, vector<4x128xf32>, vector<128x128xf32> -> vector<128x128xf32>
    %50 = arith.addf %44, %49 : vector<128x128xf32>
    %c0_64 = arith.constant 0 : index
    %c0_65 = arith.constant 0 : index
    %c0_66 = arith.constant 0 : index
    %c17 = arith.constant 17 : index
    %c0_67 = arith.constant 0 : index
    %51 = vector.load %arg2[%c0_64, %c0_65, %c0_66, %c17, %c0_67] : memref<1x4x1x160x4xf32, #tpu.memory_space<vmem>>, vector<1x1x1x128x4xf32>
    %52 = vector.shape_cast %51 : vector<1x1x1x128x4xf32> to vector<128x4xf32>
    %c8 = arith.constant 8 : index
    %c0_68 = arith.constant 0 : index
    %c0_69 = arith.constant 0 : index
    %53 = vector.load %arg3[%c8, %c0_68, %c0_69] : memref<9x4x128xf32, #tpu.memory_space<vmem>>, vector<1x4x128xf32>
    %54 = vector.shape_cast %53 : vector<1x4x128xf32> to vector<4x128xf32>
    %cst_70 = arith.constant dense<0.000000e+00> : vector<128x128xf32>
    %55 = tpu.matmul %52, %54, %cst_70 {dimension_numbers = #tpu.dot_dimension_numbers<[1], [0], [0], [1], [0, 0, 1, 1], [], []>} : vector<128x4xf32>, vector<4x128xf32>, vector<128x128xf32> -> vector<128x128xf32>
    %56 = arith.addf %50, %55 : vector<128x128xf32>
    %c0_71 = arith.constant 0 : index
    %c0_72 = arith.constant 0 : index
    %c0_73 = arith.constant 0 : index
    %c0_74 = arith.constant 0 : index
    %57 = vector.load %arg5[%c0_71, %c0_72, %c0_73, %c0_74] : memref<1x1x128x128xf32, #tpu.memory_space<vmem>>, vector<1x1x128x128xf32>
    %58 = vector.shape_cast %57 : vector<1x1x128x128xf32> to vector<128x128xf32>
    %59 = vector.shape_cast %56 : vector<128x128xf32> to vector<1x1x128x128xf32>
    tpu.vector_store %arg5[%c0_71, %c0_72, %c0_73, %c0_74], %59 {strides = array<i32>} : memref<1x1x128x128xf32, #tpu.memory_space<vmem>>, vector<1x1x128x128xf32>,
    return
  }
  func.func @transform_0(%arg0: i32, %arg1: i32) -> (i32, i32, i32, i32, i32) {
    %c0_i32 = arith.constant 0 : i32
    %c0_i32_0 = arith.constant 0 : i32
    %c0_i32_1 = arith.constant 0 : i32
    %c0_i32_2 = arith.constant 0 : i32
    return %arg0, %c0_i32, %arg1, %c0_i32_0, %c0_i32_1 : i32, i32, i32, i32, i32
  }
  func.func @transform_1(%arg0: i32, %arg1: i32) -> (i32, i32, i32) {
    %c0_i32 = arith.constant 0 : i32
    %c0_i32_0 = arith.constant 0 : i32
    %c0_i32_1 = arith.constant 0 : i32
    %c0_i32_2 = arith.constant 0 : i32
    return %c0_i32, %c0_i32_0, %c0_i32_1 : i32, i32, i32
  }
  func.func @transform_2(%arg0: i32, %arg1: i32) -> (i32, i32) {
    %c0_i32 = arith.constant 0 : i32
    %c0_i32_0 = arith.constant 0 : i32
    %c0_i32_1 = arith.constant 0 : i32
    return %c0_i32, %c0_i32_0 : i32, i32
  }
  func.func @transform_3(%arg0: i32, %arg1: i32) -> (i32, i32, i32, i32) {
    %c0_i32 = arith.constant 0 : i32
    %c0_i32_0 = arith.constant 0 : i32
    %c0_i32_1 = arith.constant 0 : i32
    return %arg0, %arg1, %c0_i32, %c0_i32_0 : i32, i32, i32, i32
  }
}

</mosaic_0001>

<llo_original>
// kernel: downsample_avg_conv.1
$region0: #{downsample_avg_conv.1}
  #allocation0 [shape = 'u32[]', space=smem, size = 0x4, offset = 0x4, fixed_abs, tag = 'smem constant byte address 0x4 - core index']
  #allocation1 [shape = 'u32[144,128]{1,0:T(1,128)}', space=vmem, size = 0x12000, scoped, tag = 'internal scratch']
  %s0 = inlined_call_operand.hbm [shape: f32[2,4,1,160,4], index: 0, kind: input, shape index: {}]
  %s1 = inlined_call_operand.hbm [shape: f32[9,4,128], index: 1, kind: input, shape index: {}]
  %s2 = inlined_call_operand.hbm [shape: f32[1,128], index: 2, kind: input, shape index: {}]
  %s3 = inlined_call_operand.hbm [shape: f32[2,1,128,128], index: 3, kind: output, shape index: {}]
  %s4 = sld [smem:[#allocation0]]
  $region57: #{downsample_avg_conv.1} parent=0
    _
  %s6 = ssub.s32 1, %s4
  %s7 = scalar_select 0, %s6, %s4
  $region1: #{downsample_avg_conv.1} parent=0
    #allocation2 [shape = 'u8[655360]{0}', space=vmem, size = 0xa0000, scoped, tag = 'input window, operand 0']
    #allocation3 [shape = 's32[2]{0}', space=sflag, size = 0x8, scoped, tag = 'scoped memory for downsample_avg_conv.1']
    #allocation4 [shape = 's32[2]{0}', space=sflag, size = 0x8, scoped, tag = 'scoped memory for downsample_avg_conv.1']
    #allocation5 [shape = 'u8[18432]{0}', space=vmem, size = 0x4800, scoped, tag = 'input window, operand 1, single buffered']
    #allocation6 [shape = 's32[1]{0}', space=sflag, size = 0x4, scoped, tag = 'scoped memory for downsample_avg_conv.1']
    #allocation7 [shape = 'u8[512]{0}', space=vmem, size = 0x400, scoped, tag = 'input window, operand 2, single buffered']
    #allocation8 [shape = 'u8[131072]{0}', space=vmem, size = 0x20000, scoped, tag = 'output window, operand 0']
    %8 = vsyncpa [#allocation3], 0
    %s9 = scalar_lea.sflag [#allocation3], 1
    %10 = vsyncpa %s9, 0
    %11 = vsyncpa [#allocation6], 0
    %12 = vsyncpa [#allocation4], 0
    %s13 = scalar_lea.sflag [#allocation4], 1
    %14 = vsyncpa %s13, 0
    loop: start=0, step=1, limit=4
    $region2: #{downsample_avg_conv.1} parent=1 // loop_pre_header
      _
    $region3: #{downsample_avg_conv.1} parent=1 // loop_header
      %s16 = sphi 0, %s20
      %p17 = scmp.ge.s32.totalorder %s16, 4
      %s23 = sphi 0, %s35
      %s24 = sphi 0, %s31
      %s25 = sphi 0, %s23
      %s26 = sphi 0, %s24
      %s27 = sphi 0, %s25
      %s28 = sphi 0, %s26
      %s40 = sphi 0, %s42
      %s43 = sphi 0, %s40
      %s44 = sphi 0, %s43
      %s60 = sphi 0, %s44
      %s64 = sphi 0, %s64
      %s66 = sphi 0, %s64
      %s67 = sphi 0, %s66
      %s81 = sphi 0, %s67
      %s85 = sphi 0, %s85
      %s87 = sphi 0, %s85
      %s88 = sphi 0, %s87
      %s102 = sphi 0, %s88
      %s110 = sphi 0, %s112
      %s113 = sphi 0, %s110
      %s114 = sphi 0, %s113
      %s130 = sphi 0, %s114
    $region4: #{downsample_avg_conv.1} parent=1 // loop_header_branch
      %19 = sbr.rel (%p17) target = $region8
    $region5: #{downsample_avg_conv.1} parent=1 // loop_body
      %s21 = ssub.s32 %s16, 1
      %s22 = ssub.s32 %s16, 2
      %s29 = sadd.s32 1, %s24
      %p30 = scmp.ge.s32.totalorder %s29, 1
      %s31 = scalar_select %p30, 0, %s29
      %s32 = sadd.s32 1, %s23
      %s33 = scalar_select %p30, %s32, %s23
      %p34 = scmp.ge.s32.totalorder %s33, 2
      %s35 = scalar_select %p34, 0, %s33
      %s36 = ssub.s32 %s23, %s35
      %s37 = ssub.s32 %s24, %s31
      %s38 = sor.u32 %s36, %s37
      %p39 = scmp.eq.s32.totalorder %s38, 0
      %s41 = sadd.s32 %s40, 1
      %s42 = scalar_select %p39, %s40, %s41
      %p45 = pneg %p39
      %p46 = scmp.eq.s32.totalorder %s16, 1
      %p47 = por %p45, %p46
      %p48 = scmp.ne.s32.totalorder %s40, %s43
      %p49 = scmp.eq.s32.totalorder %s16, 0
      %p50 = por %p48, %p49
      %p51 = scmp.ne.s32.totalorder %s40, %s43
      %p52 = scmp.eq.s32.totalorder %s21, 1
      %p53 = por %p51, %p52
      %p54 = scmp.ne.s32.totalorder %s43, %s44
      %p55 = scmp.eq.s32.totalorder %s21, 0
      %p56 = por %p54, %p55
      %p57 = scmp.ne.s32.totalorder %s43, %s44
      %p58 = scmp.eq.s32.totalorder %s22, 1
      %p59 = por %p57, %p58
      %p61 = scmp.ne.s32.totalorder %s44, %s60
      %p62 = scmp.eq.s32.totalorder %s22, 0
      %p63 = por %p61, %p62
      %s65 = sadd.s32 %s64, 1
      %p68 = scmp.eq.s32.totalorder %s16, 1
      %p69 = scmp.ne.s32.totalorder %s64, %s66
      %p70 = scmp.eq.s32.totalorder %s16, 0
      %p71 = por %p69, %p70
      %p72 = scmp.ne.s32.totalorder %s64, %s66
      %p73 = scmp.eq.s32.totalorder %s21, 1
      %p74 = por %p72, %p73
      %p75 = scmp.ne.s32.totalorder %s66, %s67
      %p76 = scmp.eq.s32.totalorder %s21, 0
      %p77 = por %p75, %p76
      %p78 = scmp.ne.s32.totalorder %s66, %s67
      %p79 = scmp.eq.s32.totalorder %s22, 1
      %p80 = por %p78, %p79
      %p82 = scmp.ne.s32.totalorder %s67, %s81
      %p83 = scmp.eq.s32.totalorder %s22, 0
      %p84 = por %p82, %p83
      %s86 = sadd.s32 %s85, 1
      %p89 = scmp.eq.s32.totalorder %s16, 1
      %p90 = scmp.ne.s32.totalorder %s85, %s87
      %p91 = scmp.eq.s32.totalorder %s16, 0
      %p92 = por %p90, %p91
      %p93 = scmp.ne.s32.totalorder %s85, %s87
      %p94 = scmp.eq.s32.totalorder %s21, 1
      %p95 = por %p93, %p94
      %p96 = scmp.ne.s32.totalorder %s87, %s88
      %p97 = scmp.eq.s32.totalorder %s21, 0
      %p98 = por %p96, %p97
      %p99 = scmp.ne.s32.totalorder %s87, %s88
      %p100 = scmp.eq.s32.totalorder %s22, 1
      %p101 = por %p99, %p100
      %p103 = scmp.ne.s32.totalorder %s88, %s102
      %p104 = scmp.eq.s32.totalorder %s22, 0
      %p105 = por %p103, %p104
      %s106 = ssub.s32 %s23, %s35
      %s107 = ssub.s32 %s24, %s31
      %s108 = sor.u32 %s106, %s107
      %p109 = scmp.eq.s32.totalorder %s108, 0
      %s111 = sadd.s32 %s110, 1
      %s112 = scalar_select %p109, %s110, %s111
      %p115 = pneg %p109
      %p116 = scmp.eq.s32.totalorder %s16, 1
      %p117 = por %p115, %p116
      %p118 = scmp.ne.s32.totalorder %s110, %s113
      %p119 = scmp.eq.s32.totalorder %s16, 0
      %p120 = por %p118, %p119
      %p121 = scmp.ne.s32.totalorder %s110, %s113
      %p122 = scmp.eq.s32.totalorder %s21, 1
      %p123 = por %p121, %p122
      %p124 = scmp.ne.s32.totalorder %s113, %s114
      %p125 = scmp.eq.s32.totalorder %s21, 0
      %p126 = por %p124, %p125
      %p127 = scmp.ne.s32.totalorder %s113, %s114
      %p128 = scmp.eq.s32.totalorder %s22, 1
      %p129 = por %p127, %p128
      %p131 = scmp.ne.s32.totalorder %s114, %s130
      %p132 = scmp.eq.s32.totalorder %s22, 0
      %p133 = por %p131, %p132
      %p134 = scmp.le.s32.totalorder 1, %s16
      %p135 = scmp.lt.s32.totalorder %s16, 3
      %p136 = pnand %p134, %p135
      %p137 = pneg %p136
      // Predicated region
      $region9: #{downsample_avg_conv.1} parent=5 // pred_check
        _
      $region10: #{downsample_avg_conv.1} parent=5 // pred_check_branch
        %139 = sbr.rel (%p136) target = $region12
      $region11: #{downsample_avg_conv.1} parent=5 // pred_region
        %s140 = ssub.s32 %s16, 1
        // Predicated region
        $region13: #{downsample_avg_conv.1} parent=11 // pred_check
          %p141 = pneg %p77
        $region14: #{downsample_avg_conv.1} parent=11 // pred_check_branch
          %143 = sbr.rel (%p141) target = $region16
        $region15: #{downsample_avg_conv.1} parent=11 // pred_region
          %s145 = ssub.s32 576, 576
          %146 = vsyncadd [#allocation6], %s145
          %s147 = sshll.u32 [#allocation5], 4
          %s148 = int_to_ptr.vmem [resolvable:$true] %s147
          %153 = dma.hbm_to_vmem [thread:$0]  %s1, 576, %s148, [#allocation6], 64, 64, 4
        $region16: #{downsample_avg_conv.1} parent=11 // pred_fallthru
          _
        // Predicated region
        $region17: #{downsample_avg_conv.1} parent=11 // pred_check
          %p154 = pneg %p98
        $region18: #{downsample_avg_conv.1} parent=11 // pred_check_branch
          %156 = sbr.rel (%p154) target = $region20
        $region19: #{downsample_avg_conv.1} parent=11 // pred_region
          %s158 = ssub.s32 16, 16
          %159 = vsyncadd [#allocation6], %s158
          %s161 = sshll.u32 [#allocation7], 4
          %s162 = int_to_ptr.vmem [resolvable:$true] %s161
          %164 = dma.hbm_to_vmem [thread:$0]  %s2, 16, %s162, [#allocation6]
        $region20: #{downsample_avg_conv.1} parent=11 // pred_fallthru
          _
      $region12: #{downsample_avg_conv.1} parent=5 // pred_fallthru
        _
      %p165 = scmp.lt.s32.totalorder %s16, 2
      // Predicated region
      $region21: #{downsample_avg_conv.1} parent=5 // pred_check
        %p166 = pneg %p165
      $region22: #{downsample_avg_conv.1} parent=5 // pred_check_branch
        %168 = sbr.rel (%p166) target = $region24
      $region23: #{downsample_avg_conv.1} parent=5 // pred_region
        // Predicated region
        $region25: #{downsample_avg_conv.1} parent=23 // pred_check
          %p169 = pneg %p50
        $region26: #{downsample_avg_conv.1} parent=23 // pred_check_branch
          %171 = sbr.rel (%p169) target = $region28
        $region27: #{downsample_avg_conv.1} parent=23 // pred_region
          %s172 = sand.u32 %s40, 1
          %s173 = scalar_lea.sflag [#allocation3], %s172
          %s174 = sand.u32 %s40, 1
          %s175 = smul.addr %s174, 640
          %s176 = scalar_lea.vmem [#allocation2], %s175
          %s178 = ssub.s32 10240, 10240
          %179 = vsyncadd %s173, %s178
          %s180 = smul.addr %s24, 20
          %s181 = smul.addr %s23, 80
          %s182 = sadd.s32 %s180, %s181
          %s183 = smul.addr %s182, 128
          %s184 = scalar_lea.hbm %s0, %s183
          %s185 = sshll.u32 %s176, 4
          %s186 = int_to_ptr.vmem [resolvable:$true] %s185
          %191 = dma.hbm_to_vmem [thread:$0]  %s184, 10240, %s186, %s173, 128, 128, 8
        $region28: #{downsample_avg_conv.1} parent=23 // pred_fallthru
          _
      $region24: #{downsample_avg_conv.1} parent=5 // pred_fallthru
        _
      %p192 = scmp.le.s32.totalorder 1, %s16
      %p193 = scmp.lt.s32.totalorder %s16, 3
      %p194 = pnand %p192, %p193
      %p195 = pneg %p194
      // Predicated region
      $region29: #{downsample_avg_conv.1} parent=5 // pred_check
        _
      $region30: #{downsample_avg_conv.1} parent=5 // pred_check_branch
        %197 = sbr.rel (%p194) target = $region32
      $region31: #{downsample_avg_conv.1} parent=5 // pred_region
        %s198 = ssub.s32 %s16, 1
        %s199 = sand.u32 %s43, 1
        %s200 = scalar_lea.sflag [#allocation3], %s199
        %s201 = sand.u32 %s43, 1
        %s202 = smul.addr %s201, 640
        %s203 = scalar_lea.vmem [#allocation2], %s202
        // Predicated region
        $region33: #{downsample_avg_conv.1} parent=31 // pred_check
          %p204 = pneg %p56
        $region34: #{downsample_avg_conv.1} parent=31 // pred_check_branch
          %206 = sbr.rel (%p204) target = $region36
        $region35: #{downsample_avg_conv.1} parent=31 // pred_region
          %207 = dma.done %s200, 10240
        $region36: #{downsample_avg_conv.1} parent=31 // pred_fallthru
          _
        // Predicated region
        $region37: #{downsample_avg_conv.1} parent=31 // pred_check
          %p208 = pneg %p77
        $region38: #{downsample_avg_conv.1} parent=31 // pred_check_branch
          %210 = sbr.rel (%p208) target = $region40
        $region39: #{downsample_avg_conv.1} parent=31 // pred_region
          %211 = dma.done [#allocation6], 576
        $region40: #{downsample_avg_conv.1} parent=31 // pred_fallthru
          _
        // Predicated region
        $region41: #{downsample_avg_conv.1} parent=31 // pred_check
          %p212 = pneg %p98
        $region42: #{downsample_avg_conv.1} parent=31 // pred_check_branch
          %214 = sbr.rel (%p212) target = $region44
        $region43: #{downsample_avg_conv.1} parent=31 // pred_region
          %215 = dma.done [#allocation6], 16
        $region44: #{downsample_avg_conv.1} parent=31 // pred_fallthru
          _
        %s216 = sand.u32 %s43, 1
        %s217 = scalar_lea.sflag [#allocation3], %s216
        %s218 = sand.u32 %s43, 1
        %s219 = smul.addr %s218, 640
        %s220 = scalar_lea.vmem [#allocation2], %s219
        %p221 = pneg %p56
        %p222 = pneg %p53
        %p223 = pneg %p77
        %p224 = pneg %p74
        %p225 = pneg %p98
        %p226 = pneg %p95
        %p227 = pneg %p126
        %p228 = pneg %p123
        %s229 = sand.u32 %s113, 1
        %s230 = scalar_lea.sflag [#allocation4], %s229
        %s231 = sand.u32 %s113, 1
        %s232 = smul.addr %s231, 128
        %s233 = scalar_lea.vmem [#allocation8], %s232
        %v234 = vld [vmem:[#allocation7] sm:$0x1]
        %v236 = vlaneseq
        %v237 = vshrl.u32 %v236, 7
        %v238 = vsub.s32 0, %v237
        %v239 = vrot.slane %v234, %v238
        %v241 = vld [vmem:[%s203] sm:$0xff]
        %v242 = vld [vmem:[%s203 + $0x8] sm:$0xff]
        %v243 = vld [vmem:[%s203 + $0x10] sm:$0xff]
        %v244 = vld [vmem:[%s203 + $0x18] sm:$0xff]
        %v245 = vld [vmem:[%s203 + $0x20] sm:$0xff]
        %v246 = vld [vmem:[%s203 + $0x28] sm:$0xff]
        %v247 = vld [vmem:[%s203 + $0x30] sm:$0xff]
        %v248 = vld [vmem:[%s203 + $0x38] sm:$0xff]
        %v249 = vld [vmem:[%s203 + $0x40] sm:$0xff]
        %v250 = vld [vmem:[%s203 + $0x48] sm:$0xff]
        %v251 = vld [vmem:[%s203 + $0x50] sm:$0xff]
        %v252 = vld [vmem:[%s203 + $0x58] sm:$0xff]
        %v253 = vld [vmem:[%s203 + $0x60] sm:$0xff]
        %v254 = vld [vmem:[%s203 + $0x68] sm:$0xff]
        %v255 = vld [vmem:[%s203 + $0x70] sm:$0xff]
        %v256 = vld [vmem:[%s203 + $0x78] sm:$0xff]
        %v257 = vld [vmem:[#allocation5] sm:$0xf]
        %vm258 = vcmask 31744
        %v260 = vsel %vm258, %v241, 0
        %v263 = vsel %vm258, %v242, 0
        %v266 = vsel %vm258, %v243, 0
        %v269 = vsel %vm258, %v244, 0
        %v272 = vsel %vm258, %v245, 0
        %v275 = vsel %vm258, %v246, 0
        %v278 = vsel %vm258, %v247, 0
        %v281 = vsel %vm258, %v248, 0
        %v284 = vsel %vm258, %v249, 0
        %v287 = vsel %vm258, %v250, 0
        %v290 = vsel %vm258, %v251, 0
        %v293 = vsel %vm258, %v252, 0
        %v296 = vsel %vm258, %v253, 0
        %v299 = vsel %vm258, %v254, 0
        %v302 = vsel %vm258, %v255, 0
        %v305 = vsel %vm258, %v256, 0
        %vm307 = vcmask 1043456
        %v309 = vsel %vm307, %v257, 0
        %311 = vmatprep.subr.mxu0 0.0
        %312 = vmatpush1.msra.mxu0 %v309
        %313 = vmatprep.subr.mxu0 0.0
        %314 = vmatpush1.msra.mxu0 0.0
        %315 = vmatprep.subr.mxu0 0.0
        %316 = vmatpush1.msra.mxu0 0.0
        %317 = vmatprep.subr.mxu0 0.0
        %318 = vmatpush1.msra.mxu0 0.0
        %319 = vmatprep.subr.mxu0 0.0
        %320 = vmatpush1.msra.mxu0 0.0
        %321 = vmatprep.subr.mxu0 0.0
        %322 = vmatpush1.msra.mxu0 0.0
        %323 = vmatprep.subr.mxu0 0.0
        %324 = vmatpush1.msra.mxu0 0.0
        %325 = vmatprep.subr.mxu0 0.0
        %326 = vmatpush1.msra.mxu0 0.0
        %327 = vmatprep.subr.mxu0 0.0
        %328 = vmatpush1.msra.mxu0 0.0
        %329 = vmatprep.subr.mxu0 0.0
        %330 = vmatpush1.msra.mxu0 0.0
        %331 = vmatprep.subr.mxu0 0.0
        %332 = vmatpush1.msra.mxu0 0.0
        %333 = vmatprep.subr.mxu0 0.0
        %334 = vmatpush1.msra.mxu0 0.0
        %335 = vmatprep.subr.mxu0 0.0
        %336 = vmatpush1.msra.mxu0 0.0
        %337 = vmatprep.subr.mxu0 0.0
        %338 = vmatpush1.msra.mxu0 0.0
        %339 = vmatprep.subr.mxu0 0.0
        %340 = vmatpush1.msra.mxu0 0.0
        %341 = vmatprep.subr.mxu0 0.0
        %342 = vmatpush1.msra.mxu0 0.0
        %343 = vmatprep.subr.mxu0 0.0
        %344 = vmatpush1.msra.mxu0 0.0
        %345 = vmatprep.subr.mxu0 0.0
        %346 = vmatpush1.msra.mxu0 0.0
        %347 = vmatprep.subr.mxu0 0.0
        %348 = vmatpush1.msra.mxu0 0.0
        %349 = vmatprep.subr.mxu0 0.0
        %350 = vmatpush1.msra.mxu0 0.0
        %351 = vmatprep.subr.mxu0 0.0
        %352 = vmatpush1.msra.mxu0 0.0
        %353 = vmatprep.subr.mxu0 0.0
        %354 = vmatpush1.msra.mxu0 0.0
        %355 = vmatprep.subr.mxu0 0.0
        %356 = vmatpush1.msra.mxu0 0.0
        %357 = vmatprep.subr.mxu0 0.0
        %358 = vmatpush1.msra.mxu0 0.0
        %359 = vmatprep.subr.mxu0 0.0
        %360 = vmatpush1.msra.mxu0 0.0
        %361 = vmatprep.subr.mxu0 0.0
        %362 = vmatpush1.msra.mxu0 0.0
        %363 = vmatprep.subr.mxu0 0.0
        %364 = vmatpush1.msra.mxu0 0.0
        %365 = vmatprep.subr.mxu0 0.0
        %366 = vmatpush1.msra.mxu0 0.0
        %367 = vmatprep.subr.mxu0 0.0
        %368 = vmatpush1.msra.mxu0 0.0
        %369 = vmatprep.subr.mxu0 0.0
        %370 = vmatpush1.msra.mxu0 0.0
        %371 = vmatprep.subr.mxu0 0.0
        %372 = vmatpush1.msra.mxu0 0.0
        %373 = vmatprep.subr.mxu0 0.0
        %374 = vmatpush1.msra.mxu0 0.0
        %375 = vmatprep.mubr.f32.mxu0 0.0
        %376 = vmatmul.mubr.f32.gmra.mrb[0].mxu0 %v260
        %v377 = vpop.f32.mrb[0].mxu0
        %v378 = vadd.f32 0.0, %v377
        %v379 = vpop.f32.mrb[0].mxu0
        %380 = vmatprep.mubr.f32.mxu0 0.0
        %381 = vmatmul.mubr.f32.gmra.mrb[0].mxu0 %v263
        %v382 = vpop.f32.mrb[0].mxu0
        %v383 = vadd.f32 0.0, %v382
        %v384 = vpop.f32.mrb[0].mxu0
        %385 = vmatprep.mubr.f32.mxu0 0.0
        %386 = vmatmul.mubr.f32.gmra.mrb[0].mxu0 %v266
        %v387 = vpop.f32.mrb[0].mxu0
        %v388 = vadd.f32 0.0, %v387
        %v389 = vpop.f32.mrb[0].mxu0
        %390 = vmatprep.mubr.f32.mxu0 0.0
        %391 = vmatmul.mubr.f32.gmra.mrb[0].mxu0 %v269
        %v392 = vpop.f32.mrb[0].mxu0
        %v393 = vadd.f32 0.0, %v392
        %v394 = vpop.f32.mrb[0].mxu0
        %395 = vmatprep.mubr.f32.mxu0 0.0
        %396 = vmatmul.mubr.f32.gmra.mrb[0].mxu0 %v272
        %v397 = vpop.f32.mrb[0].mxu0
        %v398 = vadd.f32 0.0, %v397
        %v399 = vpop.f32.mrb[0].mxu0
        %400 = vmatprep.mubr.f32.mxu0 0.0
        %401 = vmatmul.mubr.f32.gmra.mrb[0].mxu0 %v275
        %v402 = vpop.f32.mrb[0].mxu0
        %v403 = vadd.f32 0.0, %v402
        %v404 = vpop.f32.mrb[0].mxu0
        %405 = vmatprep.mubr.f32.mxu0 0.0
        %406 = vmatmul.mubr.f32.gmra.mrb[0].mxu0 %v278
        %v407 = vpop.f32.mrb[0].mxu0
        %v408 = vadd.f32 0.0, %v407
        %v409 = vpop.f32.mrb[0].mxu0
        %410 = vmatprep.mubr.f32.mxu0 0.0
        %411 = vmatmul.mubr.f32.gmra.mrb[0].mxu0 %v281
        %v412 = vpop.f32.mrb[0].mxu0
        %v413 = vadd.f32 0.0, %v412
        %v414 = vpop.f32.mrb[0].mxu0
        %415 = vmatprep.mubr.f32.mxu0 0.0
        %416 = vmatmul.mubr.f32.gmra.mrb[0].mxu0 %v284
        %v417 = vpop.f32.mrb[0].mxu0
        %v418 = vadd.f32 0.0, %v417
        %v419 = vpop.f32.mrb[0].mxu0
        %420 = vmatprep.mubr.f32.mxu0 0.0
        %421 = vmatmul.mubr.f32.gmra.mrb[0].mxu0 %v287
        %v422 = vpop.f32.mrb[0].mxu0
        %v423 = vadd.f32 0.0, %v422
        %v424 = vpop.f32.mrb[0].mxu0
        %425 = vmatprep.mubr.f32.mxu0 0.0
        %426 = vmatmul.mubr.f32.gmra.mrb[0].mxu0 %v290
        %v427 = vpop.f32.mrb[0].mxu0
        %v428 = vadd.f32 0.0, %v427
        %v429 = vpop.f32.mrb[0].mxu0
        %430 = vmatprep.mubr.f32.mxu0 0.0
        %431 = vmatmul.mubr.f32.gmra.mrb[0].mxu0 %v293
        %v432 = vpop.f32.mrb[0].mxu0
        %v433 = vadd.f32 0.0, %v432
        %v434 = vpop.f32.mrb[0].mxu0
        %435 = vmatprep.mubr.f32.mxu0 0.0
        %436 = vmatmul.mubr.f32.gmra.mrb[0].mxu0 %v296
        %v437 = vpop.f32.mrb[0].mxu0
        %v438 = vadd.f32 0.0, %v437
        %v439 = vpop.f32.mrb[0].mxu0
        %440 = vmatprep.mubr.f32.mxu0 0.0
        %441 = vmatmul.mubr.f32.gmra.mrb[0].mxu0 %v299
        %v442 = vpop.f32.mrb[0].mxu0
        %v443 = vadd.f32 0.0, %v442
        %v444 = vpop.f32.mrb[0].mxu0
        %445 = vmatprep.mubr.f32.mxu0 0.0
        %446 = vmatmul.mubr.f32.gmra.mrb[0].mxu0 %v302
        %v447 = vpop.f32.mrb[0].mxu0
        %v448 = vadd.f32 0.0, %v447
        %v449 = vpop.f32.mrb[0].mxu0
        %450 = vmatprep.mubr.f32.mxu0 0.0
        %451 = vmatmul.mubr.f32.gmra.mrb[0].mxu0 %v305
        %v452 = vpop.f32.mrb[0].mxu0
        %v453 = vadd.f32 0.0, %v452
        %v454 = vpop.f32.mrb[0].mxu0
        %455 = vdwg.mxu0
        %v456 = vadd.f32 %v239, %v378
        %v457 = vadd.f32 %v239, %v383
        %v458 = vadd.f32 %v239, %v388
        %v459 = vadd.f32 %v239, %v393
        %v460 = vadd.f32 %v239, %v398
        %v461 = vadd.f32 %v239, %v403
        %v462 = vadd.f32 %v239, %v408
        %v463 = vadd.f32 %v239, %v413
        %v464 = vadd.f32 %v239, %v418
        %v465 = vadd.f32 %v239, %v423
        %v466 = vadd.f32 %v239, %v428
        %v467 = vadd.f32 %v239, %v433
        %v468 = vadd.f32 %v239, %v438
        %v469 = vadd.f32 %v239, %v443
        %v470 = vadd.f32 %v239, %v448
        %v471 = vadd.f32 %v239, %v453
        %s472 = scalar_lea.vmem %s203, 160 [#allocation2]
        %v473 = vld [vmem:[%s472] sm:$0xff]
        %v474 = vld [vmem:[%s472 + $0x8] sm:$0xff]
        %v475 = vld [vmem:[%s472 + $0x10] sm:$0xff]
        %v476 = vld [vmem:[%s472 + $0x18] sm:$0xff]
        %v477 = vld [vmem:[%s472 + $0x20] sm:$0xff]
        %v478 = vld [vmem:[%s472 + $0x28] sm:$0xff]
        %v479 = vld [vmem:[%s472 + $0x30] sm:$0xff]
        %v480 = vld [vmem:[%s472 + $0x38] sm:$0xff]
        %v481 = vld [vmem:[%s472 + $0x40] sm:$0xff]
        %v482 = vld [vmem:[%s472 + $0x48] sm:$0xff]
        %v483 = vld [vmem:[%s472 + $0x50] sm:$0xff]
        %v484 = vld [vmem:[%s472 + $0x58] sm:$0xff]
        %v485 = vld [vmem:[%s472 + $0x60] sm:$0xff]
        %v486 = vld [vmem:[%s472 + $0x68] sm:$0xff]
        %v487 = vld [vmem:[%s472 + $0x70] sm:$0xff]
        %v488 = vld [vmem:[%s472 + $0x78] sm:$0xff]
        %s489 = scalar_lea.vmem [#allocation5], 4
        %v490 = vld [vmem:[%s489] sm:$0xf]
        %v492 = vsel %vm258, %v473, 0
        %v495 = vsel %vm258, %v474, 0
        %v498 = vsel %vm258, %v475, 0
        %v501 = vsel %vm258, %v476, 0
        %v504 = vsel %vm258, %v477, 0
        %v507 = vsel %vm258, %v478, 0
        %v510 = vsel %vm258, %v479, 0
        %v513 = vsel %vm258, %v480, 0
        %v516 = vsel %vm258, %v481, 0
        %v519 = vsel %vm258, %v482, 0
        %v522 = vsel %vm258, %v483, 0
        %v525 = vsel %vm258, %v484, 0
        %v528 = vsel %vm258, %v485, 0
        %v531 = vsel %vm258, %v486, 0
        %v534 = vsel %vm258, %v487, 0
        %v537 = vsel %vm258, %v488, 0
        %v540 = vsel %vm307, %v490, 0
        %542 = vmatprep.subr.mxu0 0.0
        %543 = vmatpush1.msra.mxu0 %v540
        %544 = vmatprep.subr.mxu0 0.0
        %545 = vmatpush1.msra.mxu0 0.0
        %546 = vmatprep.subr.mxu0 0.0
        %547 = vmatpush1.msra.mxu0 0.0
        %548 = vmatprep.subr.mxu0 0.0
        %549 = vmatpush1.msra.mxu0 0.0
        %550 = vmatprep.subr.mxu0 0.0
        %551 = vmatpush1.msra.mxu0 0.0
        %552 = vmatprep.subr.mxu0 0.0
        %553 = vmatpush1.msra.mxu0 0.0
        %554 = vmatprep.subr.mxu0 0.0
        %555 = vmatpush1.msra.mxu0 0.0
        %556 = vmatprep.subr.mxu0 0.0
        %557 = vmatpush1.msra.mxu0 0.0
        %558 = vmatprep.subr.mxu0 0.0
        %559 = vmatpush1.msra.mxu0 0.0
        %560 = vmatprep.subr.mxu0 0.0
        %561 = vmatpush1.msra.mxu0 0.0
        %562 = vmatprep.subr.mxu0 0.0
        %563 = vmatpush1.msra.mxu0 0.0
        %564 = vmatprep.subr.mxu0 0.0
        %565 = vmatpush1.msra.mxu0 0.0
        %566 = vmatprep.subr.mxu0 0.0
        %567 = vmatpush1.msra.mxu0 0.0
        %568 = vmatprep.subr.mxu0 0.0
        %569 = vmatpush1.msra.mxu0 0.0
        %570 = vmatprep.subr.mxu0 0.0
        %571 = vmatpush1.msra.mxu0 0.0
        %572 = vmatprep.subr.mxu0 0.0
        %573 = vmatpush1.msra.mxu0 0.0
        %574 = vmatprep.subr.mxu0 0.0
        %575 = vmatpush1.msra.mxu0 0.0
        %576 = vmatprep.subr.mxu0 0.0
        %577 = vmatpush1.msra.mxu0 0.0
        %578 = vmatprep.subr.mxu0 0.0
        %579 = vmatpush1.msra.mxu0 0.0
        %580 = vmatprep.subr.mxu0 0.0
        %581 = vmatpush1.msra.mxu0 0.0
        %582 = vmatprep.subr.mxu0 0.0
        %583 = vmatpush1.msra.mxu0 0.0
        %584 = vmatprep.subr.mxu0 0.0
        %585 = vmatpush1.msra.mxu0 0.0
        %586 = vmatprep.subr.mxu0 0.0
        %587 = vmatpush1.msra.mxu0 0.0
        %588 = vmatprep.subr.mxu0 0.0
        %589 = vmatpush1.msra.mxu0 0.0
        %590 = vmatprep.subr.mxu0 0.0
        %591 = vmatpush1.msra.mxu0 0.0
        %592 = vmatprep.subr.mxu0 0.0
        %593 = vmatpush1.msra.mxu0 0.0
        %594 = vmatprep.subr.mxu0 0.0
        %595 = vmatpush1.msra.mxu0 0.0
        %596 = vmatprep.subr.mxu0 0.0
        %597 = vmatpush1.msra.mxu0 0.0
        %598 = vmatprep.subr.mxu0 0.0
        %599 = vmatpush1.msra.mxu0 0.0
        %600 = vmatprep.subr.mxu0 0.0
        %601 = vmatpush1.msra.mxu0 0.0
        %602 = vmatprep.subr.mxu0 0.0
        %603 = vmatpush1.msra.mxu0 0.0
        %604 = vmatprep.subr.mxu0 0.0
        %605 = vmatpush1.msra.mxu0 0.0
        %606 = vmatprep.mubr.f32.mxu0 0.0
        %607 = vmatmul.mubr.f32.gmra.mrb[0].mxu0 %v492
        %v608 = vpop.f32.mrb[0].mxu0
        %v609 = vadd.f32 0.0, %v608
        %v610 = vpop.f32.mrb[0].mxu0
        %611 = vmatprep.mubr.f32.mxu0 0.0
        %612 = vmatmul.mubr.f32.gmra.mrb[0].mxu0 %v495
        %v613 = vpop.f32.mrb[0].mxu0
        %v614 = vadd.f32 0.0, %v613
        %v615 = vpop.f32.mrb[0].mxu0
        %616 = vmatprep.mubr.f32.mxu0 0.0
        %617 = vmatmul.mubr.f32.gmra.mrb[0].mxu0 %v498
        %v618 = vpop.f32.mrb[0].mxu0
        %v619 = vadd.f32 0.0, %v618
        %v620 = vpop.f32.mrb[0].mxu0
        %621 = vmatprep.mubr.f32.mxu0 0.0
        %622 = vmatmul.mubr.f32.gmra.mrb[0].mxu0 %v501
        %v623 = vpop.f32.mrb[0].mxu0
        %v624 = vadd.f32 0.0, %v623
        %v625 = vpop.f32.mrb[0].mxu0
        %626 = vmatprep.mubr.f32.mxu0 0.0
        %627 = vmatmul.mubr.f32.gmra.mrb[0].mxu0 %v504
        %v628 = vpop.f32.mrb[0].mxu0
        %v629 = vadd.f32 0.0, %v628
        %v630 = vpop.f32.mrb[0].mxu0
        %631 = vmatprep.mubr.f32.mxu0 0.0
        %632 = vmatmul.mubr.f32.gmra.mrb[0].mxu0 %v507
        %v633 = vpop.f32.mrb[0].mxu0
        %v634 = vadd.f32 0.0, %v633
        %v635 = vpop.f32.mrb[0].mxu0
        %636 = vmatprep.mubr.f32.mxu0 0.0
        %637 = vmatmul.mubr.f32.gmra.mrb[0].mxu0 %v510
        %v638 = vpop.f32.mrb[0].mxu0
        %v639 = vadd.f32 0.0, %v638
        %v640 = vpop.f32.mrb[0].mxu0
        %641 = vmatprep.mubr.f32.mxu0 0.0
        %642 = vmatmul.mubr.f32.gmra.mrb[0].mxu0 %v513
        %v643 = vpop.f32.mrb[0].mxu0
        %v644 = vadd.f32 0.0, %v643
        %v645 = vpop.f32.mrb[0].mxu0
        %646 = vmatprep.mubr.f32.mxu0 0.0
        %647 = vmatmul.mubr.f32.gmra.mrb[0].mxu0 %v516
        %v648 = vpop.f32.mrb[0].mxu0
        %v649 = vadd.f32 0.0, %v648
        %v650 = vpop.f32.mrb[0].mxu0
        %651 = vmatprep.mubr.f32.mxu0 0.0
        %652 = vmatmul.mubr.f32.gmra.mrb[0].mxu0 %v519
        %v653 = vpop.f32.mrb[0].mxu0
        %v654 = vadd.f32 0.0, %v653
        %v655 = vpop.f32.mrb[0].mxu0
        %656 = vmatprep.mubr.f32.mxu0 0.0
        %657 = vmatmul.mubr.f32.gmra.mrb[0].mxu0 %v522
        %v658 = vpop.f32.mrb[0].mxu0
        %v659 = vadd.f32 0.0, %v658
        %v660 = vpop.f32.mrb[0].mxu0
        %661 = vmatprep.mubr.f32.mxu0 0.0
        %662 = vmatmul.mubr.f32.gmra.mrb[0].mxu0 %v525
        %v663 = vpop.f32.mrb[0].mxu0
        %v664 = vadd.f32 0.0, %v663
        %v665 = vpop.f32.mrb[0].mxu0
        %666 = vmatprep.mubr.f32.mxu0 0.0
        %667 = vmatmul.mubr.f32.gmra.mrb[0].mxu0 %v528
        %v668 = vpop.f32.mrb[0].mxu0
        %v669 = vadd.f32 0.0, %v668
        %v670 = vpop.f32.mrb[0].mxu0
        %671 = vmatprep.mubr.f32.mxu0 0.0
        %672 = vmatmul.mubr.f32.gmra.mrb[0].mxu0 %v531
        %v673 = vpop.f32.mrb[0].mxu0
        %v674 = vadd.f32 0.0, %v673
        %v675 = vpop.f32.mrb[0].mxu0
        %676 = vmatprep.mubr.f32.mxu0 0.0
        %677 = vmatmul.mubr.f32.gmra.mrb[0].mxu0 %v534
        %v678 = vpop.f32.mrb[0].mxu0
        %v679 = vadd.f32 0.0, %v678
        %v680 = vpop.f32.mrb[0].mxu0
        %681 = vmatprep.mubr.f32.mxu0 0.0
        %682 = vmatmul.mubr.f32.gmra.mrb[0].mxu0 %v537
        %v683 = vpop.f32.mrb[0].mxu0
        %v684 = vadd.f32 0.0, %v683
        %v685 = vpop.f32.mrb[0].mxu0
        %686 = vdwg.mxu0
        %v687 = vadd.f32 %v456, %v609
        %v688 = vadd.f32 %v457, %v614
        %v689 = vadd.f32 %v458, %v619
        %v690 = vadd.f32 %v459, %v624
        %v691 = vadd.f32 %v460, %v629
        %v692 = vadd.f32 %v461, %v634
        %v693 = vadd.f32 %v462, %v639
        %v694 = vadd.f32 %v463, %v644
        %v695 = vadd.f32 %v464, %v649
        %v696 = vadd.f32 %v465, %v654
        %v697 = vadd.f32 %v466, %v659
        %v698 = vadd.f32 %v467, %v664
        %v699 = vadd.f32 %v468, %v669
        %v700 = vadd.f32 %v469, %v674
        %v701 = vadd.f32 %v470, %v679
        %v702 = vadd.f32 %v471, %v684
        %v703 = vld [vmem:[%s203 + $0x1] sm:$0xff]
        %v704 = vld [vmem:[%s203 + $0x9] sm:$0xff]
        %v705 = vld [vmem:[%s203 + $0x11] sm:$0xff]
        %v706 = vld [vmem:[%s203 + $0x19] sm:$0xff]
        %v707 = vld [vmem:[%s203 + $0x21] sm:$0xff]
        %v708 = vld [vmem:[%s203 + $0x29] sm:$0xff]
        %v709 = vld [vmem:[%s203 + $0x31] sm:$0xff]
        %v710 = vld [vmem:[%s203 + $0x39] sm:$0xff]
        %v711 = vld [vmem:[%s203 + $0x41] sm:$0xff]
        %v712 = vld [vmem:[%s203 + $0x49] sm:$0xff]
        %v713 = vld [vmem:[%s203 + $0x51] sm:$0xff]
        %v714 = vld [vmem:[%s203 + $0x59] sm:$0xff]
        %v715 = vld [vmem:[%s203 + $0x61] sm:$0xff]
        %v716 = vld [vmem:[%s203 + $0x69] sm:$0xff]
        %v717 = vld [vmem:[%s203 + $0x71] sm:$0xff]
        %v718 = vld [vmem:[%s203 + $0x79] sm:$0xff]
        %s719 = scalar_lea.vmem [#allocation5], 8
        %v720 = vld [vmem:[%s719] sm:$0xf]
        %v722 = vsel %vm258, %v703, 0
        %v725 = vsel %vm258, %v704, 0
        %v728 = vsel %vm258, %v705, 0
        %v731 = vsel %vm258, %v706, 0
        %v734 = vsel %vm258, %v707, 0
        %v737 = vsel %vm258, %v708, 0
        %v740 = vsel %vm258, %v709, 0
        %v743 = vsel %vm258, %v710, 0
        %v746 = vsel %vm258, %v711, 0
        %v749 = vsel %vm258, %v712, 0
        %v752 = vsel %vm258, %v713, 0
        %v755 = vsel %vm258, %v714, 0
        %v758 = vsel %vm258, %v715, 0
        %v761 = vsel %vm258, %v716, 0
        %v764 = vsel %vm258, %v717, 0
        %v767 = vsel %vm258, %v718, 0
        %v770 = vsel %vm307, %v720, 0
        %772 = vmatprep.subr.mxu0 0.0
        %773 = vmatpush1.msra.mxu0 %v770
        %774 = vmatprep.subr.mxu0 0.0
        %775 = vmatpush1.msra.mxu0 0.0
        %776 = vmatprep.subr.mxu0 0.0
        %777 = vmatpush1.msra.mxu0 0.0
        %778 = vmatprep.subr.mxu0 0.0
        %779 = vmatpush1.msra.mxu0 0.0
        %780 = vmatprep.subr.mxu0 0.0
        %781 = vmatpush1.msra.mxu0 0.0
        %782 = vmatprep.subr.mxu0 0.0
        %783 = vmatpush1.msra.mxu0 0.0
        %784 = vmatprep.subr.mxu0 0.0
        %785 = vmatpush1.msra.mxu0 0.0
        %786 = vmatprep.subr.mxu0 0.0
        %787 = vmatpush1.msra.mxu0 0.0
        %788 = vmatprep.subr.mxu0 0.0
        %789 = vmatpush1.msra.mxu0 0.0
        %790 = vmatprep.subr.mxu0 0.0
        %791 = vmatpush1.msra.mxu0 0.0
        %792 = vmatprep.subr.mxu0 0.0
        %793 = vmatpush1.msra.mxu0 0.0
        %794 = vmatprep.subr.mxu0 0.0
        %795 = vmatpush1.msra.mxu0 0.0
        %796 = vmatprep.subr.mxu0 0.0
        %797 = vmatpush1.msra.mxu0 0.0
        %798 = vmatprep.subr.mxu0 0.0
        %799 = vmatpush1.msra.mxu0 0.0
        %800 = vmatprep.subr.mxu0 0.0
        %801 = vmatpush1.msra.mxu0 0.0
        %802 = vmatprep.subr.mxu0 0.0
        %803 = vmatpush1.msra.mxu0 0.0
        %804 = vmatprep.subr.mxu0 0.0
        %805 = vmatpush1.msra.mxu0 0.0
        %806 = vmatprep.subr.mxu0 0.0
        %807 = vmatpush1.msra.mxu0 0.0
        %808 = vmatprep.subr.mxu0 0.0
        %809 = vmatpush1.msra.mxu0 0.0
        %810 = vmatprep.subr.mxu0 0.0
        %811 = vmatpush1.msra.mxu0 0.0
        %812 = vmatprep.subr.mxu0 0.0
        %813 = vmatpush1.msra.mxu0 0.0
        %814 = vmatprep.subr.mxu0 0.0
        %815 = vmatpush1.msra.mxu0 0.0
        %816 = vmatprep.subr.mxu0 0.0
        %817 = vmatpush1.msra.mxu0 0.0
        %818 = vmatprep.subr.mxu0 0.0
        %819 = vmatpush1.msra.mxu0 0.0
        %820 = vmatprep.subr.mxu0 0.0
        %821 = vmatpush1.msra.mxu0 0.0
        %822 = vmatprep.subr.mxu0 0.0
        %823 = vmatpush1.msra.mxu0 0.0
        %824 = vmatprep.subr.mxu0 0.0
        %825 = vmatpush1.msra.mxu0 0.0
        %826 = vmatprep.subr.mxu0 0.0
        %827 = vmatpush1.msra.mxu0 0.0
        %828 = vmatprep.subr.mxu0 0.0
        %829 = vmatpush1.msra.mxu0 0.0
        %830 = vmatprep.subr.mxu0 0.0
        %831 = vmatpush1.msra.mxu0 0.0
        %832 = vmatprep.subr.mxu0 0.0
        %833 = vmatpush1.msra.mxu0 0.0
        %834 = vmatprep.subr.mxu0 0.0
        %835 = vmatpush1.msra.mxu0 0.0
        %836 = vmatprep.mubr.f32.mxu0 0.0
        %837 = vmatmul.mubr.f32.gmra.mrb[0].mxu0 %v722
        %v838 = vpop.f32.mrb[0].mxu0
        %v839 = vadd.f32 0.0, %v838
        %v840 = vpop.f32.mrb[0].mxu0
        %841 = vmatprep.mubr.f32.mxu0 0.0
        %842 = vmatmul.mubr.f32.gmra.mrb[0].mxu0 %v725
        %v843 = vpop.f32.mrb[0].mxu0
        %v844 = vadd.f32 0.0, %v843
        %v845 = vpop.f32.mrb[0].mxu0
        %846 = vmatprep.mubr.f32.mxu0 0.0
        %847 = vmatmul.mubr.f32.gmra.mrb[0].mxu0 %v728
        %v848 = vpop.f32.mrb[0].mxu0
        %v849 = vadd.f32 0.0, %v848
        %v850 = vpop.f32.mrb[0].mxu0
        %851 = vmatprep.mubr.f32.mxu0 0.0
        %852 = vmatmul.mubr.f32.gmra.mrb[0].mxu0 %v731
        %v853 = vpop.f32.mrb[0].mxu0
        %v854 = vadd.f32 0.0, %v853
        %v855 = vpop.f32.mrb[0].mxu0
        %856 = vmatprep.mubr.f32.mxu0 0.0
        %857 = vmatmul.mubr.f32.gmra.mrb[0].mxu0 %v734
        %v858 = vpop.f32.mrb[0].mxu0
        %v859 = vadd.f32 0.0, %v858
        %v860 = vpop.f32.mrb[0].mxu0
        %861 = vmatprep.mubr.f32.mxu0 0.0
        %862 = vmatmul.mubr.f32.gmra.mrb[0].mxu0 %v737
        %v863 = vpop.f32.mrb[0].mxu0
        %v864 = vadd.f32 0.0, %v863
        %v865 = vpop.f32.mrb[0].mxu0
        %866 = vmatprep.mubr.f32.mxu0 0.0
        %867 = vmatmul.mubr.f32.gmra.mrb[0].mxu0 %v740
        %v868 = vpop.f32.mrb[0].mxu0
        %v869 = vadd.f32 0.0, %v868
        %v870 = vpop.f32.mrb[0].mxu0
        %871 = vmatprep.mubr.f32.mxu0 0.0
        %872 = vmatmul.mubr.f32.gmra.mrb[0].mxu0 %v743
        %v873 = vpop.f32.mrb[0].mxu0
        %v874 = vadd.f32 0.0, %v873
        %v875 = vpop.f32.mrb[0].mxu0
        %876 = vmatprep.mubr.f32.mxu0 0.0
        %877 = vmatmul.mubr.f32.gmra.mrb[0].mxu0 %v746
        %v878 = vpop.f32.mrb[0].mxu0
        %v879 = vadd.f32 0.0, %v878
        %v880 = vpop.f32.mrb[0].mxu0
        %881 = vmatprep.mubr.f32.mxu0 0.0
        %882 = vmatmul.mubr.f32.gmra.mrb[0].mxu0 %v749
        %v883 = vpop.f32.mrb[0].mxu0
        %v884 = vadd.f32 0.0, %v883
        %v885 = vpop.f32.mrb[0].mxu0
        %886 = vmatprep.mubr.f32.mxu0 0.0
        %887 = vmatmul.mubr.f32.gmra.mrb[0].mxu0 %v752
        %v888 = vpop.f32.mrb[0].mxu0
        %v889 = vadd.f32 0.0, %v888
        %v890 = vpop.f32.mrb[0].mxu0
        %891 = vmatprep.mubr.f32.mxu0 0.0
        %892 = vmatmul.mubr.f32.gmra.mrb[0].mxu0 %v755
        %v893 = vpop.f32.mrb[0].mxu0
        %v894 = vadd.f32 0.0, %v893
        %v895 = vpop.f32.mrb[0].mxu0
        %896 = vmatprep.mubr.f32.mxu0 0.0
        %897 = vmatmul.mubr.f32.gmra.mrb[0].mxu0 %v758
        %v898 = vpop.f32.mrb[0].mxu0
        %v899 = vadd.f32 0.0, %v898
        %v900 = vpop.f32.mrb[0].mxu0
        %901 = vmatprep.mubr.f32.mxu0 0.0
        %902 = vmatmul.mubr.f32.gmra.mrb[0].mxu0 %v761
        %v903 = vpop.f32.mrb[0].mxu0
        %v904 = vadd.f32 0.0, %v903
        %v905 = vpop.f32.mrb[0].mxu0
        %906 = vmatprep.mubr.f32.mxu0 0.0
        %907 = vmatmul.mubr.f32.gmra.mrb[0].mxu0 %v764
        %v908 = vpop.f32.mrb[0].mxu0
        %v909 = vadd.f32 0.0, %v908
        %v910 = vpop.f32.mrb[0].mxu0
        %911 = vmatprep.mubr.f32.mxu0 0.0
        %912 = vmatmul.mubr.f32.gmra.mrb[0].mxu0 %v767
        %v913 = vpop.f32.mrb[0].mxu0
        %v914 = vadd.f32 0.0, %v913
        %v915 = vpop.f32.mrb[0].mxu0
        %916 = vdwg.mxu0
        %v917 = vadd.f32 %v687, %v839
        %v918 = vadd.f32 %v688, %v844
        %v919 = vadd.f32 %v689, %v849
        %v920 = vadd.f32 %v690, %v854
        %v921 = vadd.f32 %v691, %v859
        %v922 = vadd.f32 %v692, %v864
        %v923 = vadd.f32 %v693, %v869
        %v924 = vadd.f32 %v694, %v874
        %v925 = vadd.f32 %v695, %v879
        %v926 = vadd.f32 %v696, %v884
        %v927 = vadd.f32 %v697, %v889
        %v928 = vadd.f32 %v698, %v894
        %v929 = vadd.f32 %v699, %v899
        %v930 = vadd.f32 %v700, %v904
        %v931 = vadd.f32 %v701, %v909
        %v932 = vadd.f32 %v702, %v914
        %s933 = scalar_lea.vmem %s203, 320 [#allocation2]
        %v934 = vld [vmem:[%s933] sm:$0xff]
        %v935 = vld [vmem:[%s933 + $0x8] sm:$0xff]
        %v936 = vld [vmem:[%s933 + $0x10] sm:$0xff]
        %v937 = vld [vmem:[%s933 + $0x18] sm:$0xff]
        %v938 = vld [vmem:[%s933 + $0x20] sm:$0xff]
        %v939 = vld [vmem:[%s933 + $0x28] sm:$0xff]
        %v940 = vld [vmem:[%s933 + $0x30] sm:$0xff]
        %v941 = vld [vmem:[%s933 + $0x38] sm:$0xff]
        %v942 = vld [vmem:[%s933 + $0x40] sm:$0xff]
        %v943 = vld [vmem:[%s933 + $0x48] sm:$0xff]
        %v944 = vld [vmem:[%s933 + $0x50] sm:$0xff]
        %v945 = vld [vmem:[%s933 + $0x58] sm:$0xff]
        %v946 = vld [vmem:[%s933 + $0x60] sm:$0xff]
        %v947 = vld [vmem:[%s933 + $0x68] sm:$0xff]
        %v948 = vld [vmem:[%s933 + $0x70] sm:$0xff]
        %v949 = vld [vmem:[%s933 + $0x78] sm:$0xff]
        %s950 = scalar_lea.vmem [#allocation5], 12
        %v951 = vld [vmem:[%s950] sm:$0xf]
        %v953 = vsel %vm258, %v934, 0
        %v956 = vsel %vm258, %v935, 0
        %v959 = vsel %vm258, %v936, 0
        %v962 = vsel %vm258, %v937, 0
        %v965 = vsel %vm258, %v938, 0
        %v968 = vsel %vm258, %v939, 0
        %v971 = vsel %vm258, %v940, 0
        %v974 = vsel %vm258, %v941, 0
        %v977 = vsel %vm258, %v942, 0
        %v980 = vsel %vm258, %v943, 0
        %v983 = vsel %vm258, %v944, 0
        %v986 = vsel %vm258, %v945, 0
        %v989 = vsel %vm258, %v946, 0
        %v992 = vsel %vm258, %v947, 0
        %v995 = vsel %vm258, %v948, 0
        %v998 = vsel %vm258, %v949, 0
        %v1001 = vsel %vm307, %v951, 0
        %1003 = vmatprep.subr.mxu0 0.0
        %1004 = vmatpush1.msra.mxu0 %v1001
        %1005 = vmatprep.subr.mxu0 0.0
        %1006 = vmatpush1.msra.mxu0 0.0
        %1007 = vmatprep.subr.mxu0 0.0
        %1008 = vmatpush1.msra.mxu0 0.0
        %1009 = vmatprep.subr.mxu0 0.0
        %1010 = vmatpush1.msra.mxu0 0.0
        %1011 = vmatprep.subr.mxu0 0.0
        %1012 = vmatpush1.msra.mxu0 0.0
        %1013 = vmatprep.subr.mxu0 0.0
        %1014 = vmatpush1.msra.mxu0 0.0
        %1015 = vmatprep.subr.mxu0 0.0
        %1016 = vmatpush1.msra.mxu0 0.0
        %1017 = vmatprep.subr.mxu0 0.0
        %1018 = vmatpush1.msra.mxu0 0.0
        %1019 = vmatprep.subr.mxu0 0.0
        %1020 = vmatpush1.msra.mxu0 0.0
        %1021 = vmatprep.subr.mxu0 0.0
        %1022 = vmatpush1.msra.mxu0 0.0
        %1023 = vmatprep.subr.mxu0 0.0
        %1024 = vmatpush1.msra.mxu0 0.0
        %1025 = vmatprep.subr.mxu0 0.0
        %1026 = vmatpush1.msra.mxu0 0.0
        %1027 = vmatprep.subr.mxu0 0.0
        %1028 = vmatpush1.msra.mxu0 0.0
        %1029 = vmatprep.subr.mxu0 0.0
        %1030 = vmatpush1.msra.mxu0 0.0
        %1031 = vmatprep.subr.mxu0 0.0
        %1032 = vmatpush1.msra.mxu0 0.0
        %1033 = vmatprep.subr.mxu0 0.0
        %1034 = vmatpush1.msra.mxu0 0.0
        %1035 = vmatprep.subr.mxu0 0.0
        %1036 = vmatpush1.msra.mxu0 0.0
        %1037 = vmatprep.subr.mxu0 0.0
        %1038 = vmatpush1.msra.mxu0 0.0
        %1039 = vmatprep.subr.mxu0 0.0
        %1040 = vmatpush1.msra.mxu0 0.0
        %1041 = vmatprep.subr.mxu0 0.0
        %1042 = vmatpush1.msra.mxu0 0.0
        %1043 = vmatprep.subr.mxu0 0.0
        %1044 = vmatpush1.msra.mxu0 0.0
        %1045 = vmatprep.subr.mxu0 0.0
        %1046 = vmatpush1.msra.mxu0 0.0
        %1047 = vmatprep.subr.mxu0 0.0
        %1048 = vmatpush1.msra.mxu0 0.0
        %1049 = vmatprep.subr.mxu0 0.0
        %1050 = vmatpush1.msra.mxu0 0.0
        %1051 = vmatprep.subr.mxu0 0.0
        %1052 = vmatpush1.msra.mxu0 0.0
        %1053 = vmatprep.subr.mxu0 0.0
        %1054 = vmatpush1.msra.mxu0 0.0
        %1055 = vmatprep.subr.mxu0 0.0
        %1056 = vmatpush1.msra.mxu0 0.0
        %1057 = vmatprep.subr.mxu0 0.0
        %1058 = vmatpush1.msra.mxu0 0.0
        %1059 = vmatprep.subr.mxu0 0.0
        %1060 = vmatpush1.msra.mxu0 0.0
        %1061 = vmatprep.subr.mxu0 0.0
        %1062 = vmatpush1.msra.mxu0 0.0
        %1063 = vmatprep.subr.mxu0 0.0
        %1064 = vmatpush1.msra.mxu0 0.0
        %1065 = vmatprep.subr.mxu0 0.0
        %1066 = vmatpush1.msra.mxu0 0.0
        %1067 = vmatprep.mubr.f32.mxu0 0.0
        %1068 = vmatmul.mubr.f32.gmra.mrb[0].mxu0 %v953
        %v1069 = vpop.f32.mrb[0].mxu0
        %v1070 = vadd.f32 0.0, %v1069
        %v1071 = vpop.f32.mrb[0].mxu0
        %1072 = vmatprep.mubr.f32.mxu0 0.0
        %1073 = vmatmul.mubr.f32.gmra.mrb[0].mxu0 %v956
        %v1074 = vpop.f32.mrb[0].mxu0
        %v1075 = vadd.f32 0.0, %v1074
        %v1076 = vpop.f32.mrb[0].mxu0
        %1077 = vmatprep.mubr.f32.mxu0 0.0
        %1078 = vmatmul.mubr.f32.gmra.mrb[0].mxu0 %v959
        %v1079 = vpop.f32.mrb[0].mxu0
        %v1080 = vadd.f32 0.0, %v1079
        %v1081 = vpop.f32.mrb[0].mxu0
        %1082 = vmatprep.mubr.f32.mxu0 0.0
        %1083 = vmatmul.mubr.f32.gmra.mrb[0].mxu0 %v962
        %v1084 = vpop.f32.mrb[0].mxu0
        %v1085 = vadd.f32 0.0, %v1084
        %v1086 = vpop.f32.mrb[0].mxu0
        %1087 = vmatprep.mubr.f32.mxu0 0.0
        %1088 = vmatmul.mubr.f32.gmra.mrb[0].mxu0 %v965
        %v1089 = vpop.f32.mrb[0].mxu0
        %v1090 = vadd.f32 0.0, %v1089
        %v1091 = vpop.f32.mrb[0].mxu0
        %1092 = vmatprep.mubr.f32.mxu0 0.0
        %1093 = vmatmul.mubr.f32.gmra.mrb[0].mxu0 %v968
        %v1094 = vpop.f32.mrb[0].mxu0
        %v1095 = vadd.f32 0.0, %v1094
        %v1096 = vpop.f32.mrb[0].mxu0
        %1097 = vmatprep.mubr.f32.mxu0 0.0
        %1098 = vmatmul.mubr.f32.gmra.mrb[0].mxu0 %v971
        %v1099 = vpop.f32.mrb[0].mxu0
        %v1100 = vadd.f32 0.0, %v1099
        %v1101 = vpop.f32.mrb[0].mxu0
        %1102 = vmatprep.mubr.f32.mxu0 0.0
        %1103 = vmatmul.mubr.f32.gmra.mrb[0].mxu0 %v974
        %v1104 = vpop.f32.mrb[0].mxu0
        %v1105 = vadd.f32 0.0, %v1104
        %v1106 = vpop.f32.mrb[0].mxu0
        %1107 = vmatprep.mubr.f32.mxu0 0.0
        %1108 = vmatmul.mubr.f32.gmra.mrb[0].mxu0 %v977
        %v1109 = vpop.f32.mrb[0].mxu0
        %v1110 = vadd.f32 0.0, %v1109
        %v1111 = vpop.f32.mrb[0].mxu0
        %1112 = vmatprep.mubr.f32.mxu0 0.0
        %1113 = vmatmul.mubr.f32.gmra.mrb[0].mxu0 %v980
        %v1114 = vpop.f32.mrb[0].mxu0
        %v1115 = vadd.f32 0.0, %v1114
        %v1116 = vpop.f32.mrb[0].mxu0
        %1117 = vmatprep.mubr.f32.mxu0 0.0
        %1118 = vmatmul.mubr.f32.gmra.mrb[0].mxu0 %v983
        %v1119 = vpop.f32.mrb[0].mxu0
        %v1120 = vadd.f32 0.0, %v1119
        %v1121 = vpop.f32.mrb[0].mxu0
        %1122 = vmatprep.mubr.f32.mxu0 0.0
        %1123 = vmatmul.mubr.f32.gmra.mrb[0].mxu0 %v986
        %v1124 = vpop.f32.mrb[0].mxu0
        %v1125 = vadd.f32 0.0, %v1124
        %v1126 = vpop.f32.mrb[0].mxu0
        %1127 = vmatprep.mubr.f32.mxu0 0.0
        %1128 = vmatmul.mubr.f32.gmra.mrb[0].mxu0 %v989
        %v1129 = vpop.f32.mrb[0].mxu0
        %v1130 = vadd.f32 0.0, %v1129
        %v1131 = vpop.f32.mrb[0].mxu0
        %1132 = vmatprep.mubr.f32.mxu0 0.0
        %1133 = vmatmul.mubr.f32.gmra.mrb[0].mxu0 %v992
        %v1134 = vpop.f32.mrb[0].mxu0
        %v1135 = vadd.f32 0.0, %v1134
        %v1136 = vpop.f32.mrb[0].mxu0
        %1137 = vmatprep.mubr.f32.mxu0 0.0
        %1138 = vmatmul.mubr.f32.gmra.mrb[0].mxu0 %v995
        %v1139 = vpop.f32.mrb[0].mxu0
        %v1140 = vadd.f32 0.0, %v1139
        %v1141 = vpop.f32.mrb[0].mxu0
        %1142 = vmatprep.mubr.f32.mxu0 0.0
        %1143 = vmatmul.mubr.f32.gmra.mrb[0].mxu0 %v998
        %v1144 = vpop.f32.mrb[0].mxu0
        %v1145 = vadd.f32 0.0, %v1144
        %v1146 = vpop.f32.mrb[0].mxu0
        %1147 = vdwg.mxu0
        %v1148 = vadd.f32 %v917, %v1070
        %v1149 = vadd.f32 %v918, %v1075
        %v1150 = vadd.f32 %v919, %v1080
        %v1151 = vadd.f32 %v920, %v1085
        %v1152 = vadd.f32 %v921, %v1090
        %v1153 = vadd.f32 %v922, %v1095
        %v1154 = vadd.f32 %v923, %v1100
        %v1155 = vadd.f32 %v924, %v1105
        %v1156 = vadd.f32 %v925, %v1110
        %v1157 = vadd.f32 %v926, %v1115
        %v1158 = vadd.f32 %v927, %v1120
        %v1159 = vadd.f32 %v928, %v1125
        %v1160 = vadd.f32 %v929, %v1130
        %v1161 = vadd.f32 %v930, %v1135
        %v1162 = vadd.f32 %v931, %v1140
        %v1163 = vadd.f32 %v932, %v1145
        %s1164 = scalar_lea.vmem %s203, 480 [#allocation2]
        %v1165 = vld [vmem:[%s1164] sm:$0xff]
        %v1166 = vld [vmem:[%s1164 + $0x8] sm:$0xff]
        %v1167 = vld [vmem:[%s1164 + $0x10] sm:$0xff]
        %v1168 = vld [vmem:[%s1164 + $0x18] sm:$0xff]
        %v1169 = vld [vmem:[%s1164 + $0x20] sm:$0xff]
        %v1170 = vld [vmem:[%s1164 + $0x28] sm:$0xff]
        %v1171 = vld [vmem:[%s1164 + $0x30] sm:$0xff]
        %v1172 = vld [vmem:[%s1164 + $0x38] sm:$0xff]
        %v1173 = vld [vmem:[%s1164 + $0x40] sm:$0xff]
        %v1174 = vld [vmem:[%s1164 + $0x48] sm:$0xff]
        %v1175 = vld [vmem:[%s1164 + $0x50] sm:$0xff]
        %v1176 = vld [vmem:[%s1164 + $0x58] sm:$0xff]
        %v1177 = vld [vmem:[%s1164 + $0x60] sm:$0xff]
        %v1178 = vld [vmem:[%s1164 + $0x68] sm:$0xff]
        %v1179 = vld [vmem:[%s1164 + $0x70] sm:$0xff]
        %v1180 = vld [vmem:[%s1164 + $0x78] sm:$0xff]
        %s1181 = scalar_lea.vmem [#allocation5], 16
        %v1182 = vld [vmem:[%s1181] sm:$0xf]
        %v1184 = vsel %vm258, %v1165, 0
        %v1187 = vsel %vm258, %v1166, 0
        %v1190 = vsel %vm258, %v1167, 0
        %v1193 = vsel %vm258, %v1168, 0
        %v1196 = vsel %vm258, %v1169, 0
        %v1199 = vsel %vm258, %v1170, 0
        %v1202 = vsel %vm258, %v1171, 0
        %v1205 = vsel %vm258, %v1172, 0
        %v1208 = vsel %vm258, %v1173, 0
        %v1211 = vsel %vm258, %v1174, 0
        %v1214 = vsel %vm258, %v1175, 0
        %v1217 = vsel %vm258, %v1176, 0
        %v1220 = vsel %vm258, %v1177, 0
        %v1223 = vsel %vm258, %v1178, 0
        %v1226 = vsel %vm258, %v1179, 0
        %v1229 = vsel %vm258, %v1180, 0
        %v1232 = vsel %vm307, %v1182, 0
        %1234 = vmatprep.subr.mxu0 0.0
        %1235 = vmatpush1.msra.mxu0 %v1232
        %1236 = vmatprep.subr.mxu0 0.0
        %1237 = vmatpush1.msra.mxu0 0.0
        %1238 = vmatprep.subr.mxu0 0.0
        %1239 = vmatpush1.msra.mxu0 0.0
        %1240 = vmatprep.subr.mxu0 0.0
        %1241 = vmatpush1.msra.mxu0 0.0
        %1242 = vmatprep.subr.mxu0 0.0
        %1243 = vmatpush1.msra.mxu0 0.0
        %1244 = vmatprep.subr.mxu0 0.0
        %1245 = vmatpush1.msra.mxu0 0.0
        %1246 = vmatprep.subr.mxu0 0.0
        %1247 = vmatpush1.msra.mxu0 0.0
        %1248 = vmatprep.subr.mxu0 0.0
        %1249 = vmatpush1.msra.mxu0 0.0
        %1250 = vmatprep.subr.mxu0 0.0
        %1251 = vmatpush1.msra.mxu0 0.0
        %1252 = vmatprep.subr.mxu0 0.0
        %1253 = vmatpush1.msra.mxu0 0.0
        %1254 = vmatprep.subr.mxu0 0.0
        %1255 = vmatpush1.msra.mxu0 0.0
        %1256 = vmatprep.subr.mxu0 0.0
        %1257 = vmatpush1.msra.mxu0 0.0
        %1258 = vmatprep.subr.mxu0 0.0
        %1259 = vmatpush1.msra.mxu0 0.0
        %1260 = vmatprep.subr.mxu0 0.0
        %1261 = vmatpush1.msra.mxu0 0.0
        %1262 = vmatprep.subr.mxu0 0.0
        %1263 = vmatpush1.msra.mxu0 0.0
        %1264 = vmatprep.subr.mxu0 0.0
        %1265 = vmatpush1.msra.mxu0 0.0
        %1266 = vmatprep.subr.mxu0 0.0
        %1267 = vmatpush1.msra.mxu0 0.0
        %1268 = vmatprep.subr.mxu0 0.0
        %1269 = vmatpush1.msra.mxu0 0.0
        %1270 = vmatprep.subr.mxu0 0.0
        %1271 = vmatpush1.msra.mxu0 0.0
        %1272 = vmatprep.subr.mxu0 0.0
        %1273 = vmatpush1.msra.mxu0 0.0
        %1274 = vmatprep.subr.mxu0 0.0
        %1275 = vmatpush1.msra.mxu0 0.0
        %1276 = vmatprep.subr.mxu0 0.0
        %1277 = vmatpush1.msra.mxu0 0.0
        %1278 = vmatprep.subr.mxu0 0.0
        %1279 = vmatpush1.msra.mxu0 0.0
        %1280 = vmatprep.subr.mxu0 0.0
        %1281 = vmatpush1.msra.mxu0 0.0
        %1282 = vmatprep.subr.mxu0 0.0
        %1283 = vmatpush1.msra.mxu0 0.0
        %1284 = vmatprep.subr.mxu0 0.0
        %1285 = vmatpush1.msra.mxu0 0.0
        %1286 = vmatprep.subr.mxu0 0.0
        %1287 = vmatpush1.msra.mxu0 0.0
        %1288 = vmatprep.subr.mxu0 0.0
        %1289 = vmatpush1.msra.mxu0 0.0
        %1290 = vmatprep.subr.mxu0 0.0
        %1291 = vmatpush1.msra.mxu0 0.0
        %1292 = vmatprep.subr.mxu0 0.0
        %1293 = vmatpush1.msra.mxu0 0.0
        %1294 = vmatprep.subr.mxu0 0.0
        %1295 = vmatpush1.msra.mxu0 0.0
        %1296 = vmatprep.subr.mxu0 0.0
        %1297 = vmatpush1.msra.mxu0 0.0
        %1298 = vmatprep.mubr.f32.mxu0 0.0
        %1299 = vmatmul.mubr.f32.gmra.mrb[0].mxu0 %v1184
        %v1300 = vpop.f32.mrb[0].mxu0
        %v1301 = vadd.f32 0.0, %v1300
        %v1302 = vpop.f32.mrb[0].mxu0
        %1303 = vmatprep.mubr.f32.mxu0 0.0
        %1304 = vmatmul.mubr.f32.gmra.mrb[0].mxu0 %v1187
        %v1305 = vpop.f32.mrb[0].mxu0
        %v1306 = vadd.f32 0.0, %v1305
        %v1307 = vpop.f32.mrb[0].mxu0
        %1308 = vmatprep.mubr.f32.mxu0 0.0
        %1309 = vmatmul.mubr.f32.gmra.mrb[0].mxu0 %v1190
        %v1310 = vpop.f32.mrb[0].mxu0
        %v1311 = vadd.f32 0.0, %v1310
        %v1312 = vpop.f32.mrb[0].mxu0
        %1313 = vmatprep.mubr.f32.mxu0 0.0
        %1314 = vmatmul.mubr.f32.gmra.mrb[0].mxu0 %v1193
        %v1315 = vpop.f32.mrb[0].mxu0
        %v1316 = vadd.f32 0.0, %v1315
        %v1317 = vpop.f32.mrb[0].mxu0
        %1318 = vmatprep.mubr.f32.mxu0 0.0
        %1319 = vmatmul.mubr.f32.gmra.mrb[0].mxu0 %v1196
        %v1320 = vpop.f32.mrb[0].mxu0
        %v1321 = vadd.f32 0.0, %v1320
        %v1322 = vpop.f32.mrb[0].mxu0
        %1323 = vmatprep.mubr.f32.mxu0 0.0
        %1324 = vmatmul.mubr.f32.gmra.mrb[0].mxu0 %v1199
        %v1325 = vpop.f32.mrb[0].mxu0
        %v1326 = vadd.f32 0.0, %v1325
        %v1327 = vpop.f32.mrb[0].mxu0
        %1328 = vmatprep.mubr.f32.mxu0 0.0
        %1329 = vmatmul.mubr.f32.gmra.mrb[0].mxu0 %v1202
        %v1330 = vpop.f32.mrb[0].mxu0
        %v1331 = vadd.f32 0.0, %v1330
        %v1332 = vpop.f32.mrb[0].mxu0
        %1333 = vmatprep.mubr.f32.mxu0 0.0
        %1334 = vmatmul.mubr.f32.gmra.mrb[0].mxu0 %v1205
        %v1335 = vpop.f32.mrb[0].mxu0
        %v1336 = vadd.f32 0.0, %v1335
        %v1337 = vpop.f32.mrb[0].mxu0
        %1338 = vmatprep.mubr.f32.mxu0 0.0
        %1339 = vmatmul.mubr.f32.gmra.mrb[0].mxu0 %v1208
        %v1340 = vpop.f32.mrb[0].mxu0
        %v1341 = vadd.f32 0.0, %v1340
        %v1342 = vpop.f32.mrb[0].mxu0
        %1343 = vmatprep.mubr.f32.mxu0 0.0
        %1344 = vmatmul.mubr.f32.gmra.mrb[0].mxu0 %v1211
        %v1345 = vpop.f32.mrb[0].mxu0
        %v1346 = vadd.f32 0.0, %v1345
        %v1347 = vpop.f32.mrb[0].mxu0
        %1348 = vmatprep.mubr.f32.mxu0 0.0
        %1349 = vmatmul.mubr.f32.gmra.mrb[0].mxu0 %v1214
        %v1350 = vpop.f32.mrb[0].mxu0
        %v1351 = vadd.f32 0.0, %v1350
        %v1352 = vpop.f32.mrb[0].mxu0
        %1353 = vmatprep.mubr.f32.mxu0 0.0
        %1354 = vmatmul.mubr.f32.gmra.mrb[0].mxu0 %v1217
        %v1355 = vpop.f32.mrb[0].mxu0
        %v1356 = vadd.f32 0.0, %v1355
        %v1357 = vpop.f32.mrb[0].mxu0
        %1358 = vmatprep.mubr.f32.mxu0 0.0
        %1359 = vmatmul.mubr.f32.gmra.mrb[0].mxu0 %v1220
        %v1360 = vpop.f32.mrb[0].mxu0
        %v1361 = vadd.f32 0.0, %v1360
        %v1362 = vpop.f32.mrb[0].mxu0
        %1363 = vmatprep.mubr.f32.mxu0 0.0
        %1364 = vmatmul.mubr.f32.gmra.mrb[0].mxu0 %v1223
        %v1365 = vpop.f32.mrb[0].mxu0
        %v1366 = vadd.f32 0.0, %v1365
        %v1367 = vpop.f32.mrb[0].mxu0
        %1368 = vmatprep.mubr.f32.mxu0 0.0
        %1369 = vmatmul.mubr.f32.gmra.mrb[0].mxu0 %v1226
        %v1370 = vpop.f32.mrb[0].mxu0
        %v1371 = vadd.f32 0.0, %v1370
        %v1372 = vpop.f32.mrb[0].mxu0
        %1373 = vmatprep.mubr.f32.mxu0 0.0
        %1374 = vmatmul.mubr.f32.gmra.mrb[0].mxu0 %v1229
        %v1375 = vpop.f32.mrb[0].mxu0
        %v1376 = vadd.f32 0.0, %v1375
        %v1377 = vpop.f32.mrb[0].mxu0
        %1378 = vdwg.mxu0
        %v1379 = vadd.f32 %v1148, %v1301
        %v1380 = vadd.f32 %v1149, %v1306
        %v1381 = vadd.f32 %v1150, %v1311
        %v1382 = vadd.f32 %v1151, %v1316
        %v1383 = vadd.f32 %v1152, %v1321
        %v1384 = vadd.f32 %v1153, %v1326
        %v1385 = vadd.f32 %v1154, %v1331
        %v1386 = vadd.f32 %v1155, %v1336
        %v1387 = vadd.f32 %v1156, %v1341
        %v1388 = vadd.f32 %v1157, %v1346
        %v1389 = vadd.f32 %v1158, %v1351
        %v1390 = vadd.f32 %v1159, %v1356
        %v1391 = vadd.f32 %v1160, %v1361
        %v1392 = vadd.f32 %v1161, %v1366
        %v1393 = vadd.f32 %v1162, %v1371
        %v1394 = vadd.f32 %v1163, %v1376
        %v1395 = vld [vmem:[%s933 + $0x1] sm:$0xff]
        %v1396 = vld [vmem:[%s933 + $0x9] sm:$0xff]
        %v1397 = vld [vmem:[%s933 + $0x11] sm:$0xff]
        %v1398 = vld [vmem:[%s933 + $0x19] sm:$0xff]
        %v1399 = vld [vmem:[%s933 + $0x21] sm:$0xff]
        %v1400 = vld [vmem:[%s933 + $0x29] sm:$0xff]
        %v1401 = vld [vmem:[%s933 + $0x31] sm:$0xff]
        %v1402 = vld [vmem:[%s933 + $0x39] sm:$0xff]
        %v1403 = vld [vmem:[%s933 + $0x41] sm:$0xff]
        %v1404 = vld [vmem:[%s933 + $0x49] sm:$0xff]
        %v1405 = vld [vmem:[%s933 + $0x51] sm:$0xff]
        %v1406 = vld [vmem:[%s933 + $0x59] sm:$0xff]
        %v1407 = vld [vmem:[%s933 + $0x61] sm:$0xff]
        %v1408 = vld [vmem:[%s933 + $0x69] sm:$0xff]
        %v1409 = vld [vmem:[%s933 + $0x71] sm:$0xff]
        %v1410 = vld [vmem:[%s933 + $0x79] sm:$0xff]
        %s1411 = scalar_lea.vmem [#allocation5], 20
        %v1412 = vld [vmem:[%s1411] sm:$0xf]
        %v1414 = vsel %vm258, %v1395, 0
        %v1417 = vsel %vm258, %v1396, 0
        %v1420 = vsel %vm258, %v1397, 0
        %v1423 = vsel %vm258, %v1398, 0
        %v1426 = vsel %vm258, %v1399, 0
        %v1429 = vsel %vm258, %v1400, 0
        %v1432 = vsel %vm258, %v1401, 0
        %v1435 = vsel %vm258, %v1402, 0
        %v1438 = vsel %vm258, %v1403, 0
        %v1441 = vsel %vm258, %v1404, 0
        %v1444 = vsel %vm258, %v1405, 0
        %v1447 = vsel %vm258, %v1406, 0
        %v1450 = vsel %vm258, %v1407, 0
        %v1453 = vsel %vm258, %v1408, 0
        %v1456 = vsel %vm258, %v1409, 0
        %v1459 = vsel %vm258, %v1410, 0
        %v1462 = vsel %vm307, %v1412, 0
        %1464 = vmatprep.subr.mxu0 0.0
        %1465 = vmatpush1.msra.mxu0 %v1462
        %1466 = vmatprep.subr.mxu0 0.0
        %1467 = vmatpush1.msra.mxu0 0.0
        %1468 = vmatprep.subr.mxu0 0.0
        %1469 = vmatpush1.msra.mxu0 0.0
        %1470 = vmatprep.subr.mxu0 0.0
        %1471 = vmatpush1.msra.mxu0 0.0
        %1472 = vmatprep.subr.mxu0 0.0
        %1473 = vmatpush1.msra.mxu0 0.0
        %1474 = vmatprep.subr.mxu0 0.0
        %1475 = vmatpush1.msra.mxu0 0.0
        %1476 = vmatprep.subr.mxu0 0.0
        %1477 = vmatpush1.msra.mxu0 0.0
        %1478 = vmatprep.subr.mxu0 0.0
        %1479 = vmatpush1.msra.mxu0 0.0
        %1480 = vmatprep.subr.mxu0 0.0
        %1481 = vmatpush1.msra.mxu0 0.0
        %1482 = vmatprep.subr.mxu0 0.0
        %1483 = vmatpush1.msra.mxu0 0.0
        %1484 = vmatprep.subr.mxu0 0.0
        %1485 = vmatpush1.msra.mxu0 0.0
        %1486 = vmatprep.subr.mxu0 0.0
        %1487 = vmatpush1.msra.mxu0 0.0
        %1488 = vmatprep.subr.mxu0 0.0
        %1489 = vmatpush1.msra.mxu0 0.0
        %1490 = vmatprep.subr.mxu0 0.0
        %1491 = vmatpush1.msra.mxu0 0.0
        %1492 = vmatprep.subr.mxu0 0.0
        %1493 = vmatpush1.msra.mxu0 0.0
        %1494 = vmatprep.subr.mxu0 0.0
        %1495 = vmatpush1.msra.mxu0 0.0
        %1496 = vmatprep.subr.mxu0 0.0
        %1497 = vmatpush1.msra.mxu0 0.0
        %1498 = vmatprep.subr.mxu0 0.0
        %1499 = vmatpush1.msra.mxu0 0.0
        %1500 = vmatprep.subr.mxu0 0.0
        %1501 = vmatpush1.msra.mxu0 0.0
        %1502 = vmatprep.subr.mxu0 0.0
        %1503 = vmatpush1.msra.mxu0 0.0
        %1504 = vmatprep.subr.mxu0 0.0
        %1505 = vmatpush1.msra.mxu0 0.0
        %1506 = vmatprep.subr.mxu0 0.0
        %1507 = vmatpush1.msra.mxu0 0.0
        %1508 = vmatprep.subr.mxu0 0.0
        %1509 = vmatpush1.msra.mxu0 0.0
        %1510 = vmatprep.subr.mxu0 0.0
        %1511 = vmatpush1.msra.mxu0 0.0
        %1512 = vmatprep.subr.mxu0 0.0
        %1513 = vmatpush1.msra.mxu0 0.0
        %1514 = vmatprep.subr.mxu0 0.0
        %1515 = vmatpush1.msra.mxu0 0.0
        %1516 = vmatprep.subr.mxu0 0.0
        %1517 = vmatpush1.msra.mxu0 0.0
        %1518 = vmatprep.subr.mxu0 0.0
        %1519 = vmatpush1.msra.mxu0 0.0
        %1520 = vmatprep.subr.mxu0 0.0
        %1521 = vmatpush1.msra.mxu0 0.0
        %1522 = vmatprep.subr.mxu0 0.0
        %1523 = vmatpush1.msra.mxu0 0.0
        %1524 = vmatprep.subr.mxu0 0.0
        %1525 = vmatpush1.msra.mxu0 0.0
        %1526 = vmatprep.subr.mxu0 0.0
        %1527 = vmatpush1.msra.mxu0 0.0
        %1528 = vmatprep.mubr.f32.mxu0 0.0
        %1529 = vmatmul.mubr.f32.gmra.mrb[0].mxu0 %v1414
        %v1530 = vpop.f32.mrb[0].mxu0
        %v1531 = vadd.f32 0.0, %v1530
        %v1532 = vpop.f32.mrb[0].mxu0
        %1533 = vmatprep.mubr.f32.mxu0 0.0
        %1534 = vmatmul.mubr.f32.gmra.mrb[0].mxu0 %v1417
        %v1535 = vpop.f32.mrb[0].mxu0
        %v1536 = vadd.f32 0.0, %v1535
        %v1537 = vpop.f32.mrb[0].mxu0
        %1538 = vmatprep.mubr.f32.mxu0 0.0
        %1539 = vmatmul.mubr.f32.gmra.mrb[0].mxu0 %v1420
        %v1540 = vpop.f32.mrb[0].mxu0
        %v1541 = vadd.f32 0.0, %v1540
        %v1542 = vpop.f32.mrb[0].mxu0
        %1543 = vmatprep.mubr.f32.mxu0 0.0
        %1544 = vmatmul.mubr.f32.gmra.mrb[0].mxu0 %v1423
        %v1545 = vpop.f32.mrb[0].mxu0
        %v1546 = vadd.f32 0.0, %v1545
        %v1547 = vpop.f32.mrb[0].mxu0
        %1548 = vmatprep.mubr.f32.mxu0 0.0
        %1549 = vmatmul.mubr.f32.gmra.mrb[0].mxu0 %v1426
        %v1550 = vpop.f32.mrb[0].mxu0
        %v1551 = vadd.f32 0.0, %v1550
        %v1552 = vpop.f32.mrb[0].mxu0
        %1553 = vmatprep.mubr.f32.mxu0 0.0
        %1554 = vmatmul.mubr.f32.gmra.mrb[0].mxu0 %v1429
        %v1555 = vpop.f32.mrb[0].mxu0
        %v1556 = vadd.f32 0.0, %v1555
        %v1557 = vpop.f32.mrb[0].mxu0
        %1558 = vmatprep.mubr.f32.mxu0 0.0
        %1559 = vmatmul.mubr.f32.gmra.mrb[0].mxu0 %v1432
        %v1560 = vpop.f32.mrb[0].mxu0
        %v1561 = vadd.f32 0.0, %v1560
        %v1562 = vpop.f32.mrb[0].mxu0
        %1563 = vmatprep.mubr.f32.mxu0 0.0
        %1564 = vmatmul.mubr.f32.gmra.mrb[0].mxu0 %v1435
        %v1565 = vpop.f32.mrb[0].mxu0
        %v1566 = vadd.f32 0.0, %v1565
        %v1567 = vpop.f32.mrb[0].mxu0
        %1568 = vmatprep.mubr.f32.mxu0 0.0
        %1569 = vmatmul.mubr.f32.gmra.mrb[0].mxu0 %v1438
        %v1570 = vpop.f32.mrb[0].mxu0
        %v1571 = vadd.f32 0.0, %v1570
        %v1572 = vpop.f32.mrb[0].mxu0
        %1573 = vmatprep.mubr.f32.mxu0 0.0
        %1574 = vmatmul.mubr.f32.gmra.mrb[0].mxu0 %v1441
        %v1575 = vpop.f32.mrb[0].mxu0
        %v1576 = vadd.f32 0.0, %v1575
        %v1577 = vpop.f32.mrb[0].mxu0
        %1578 = vmatprep.mubr.f32.mxu0 0.0
        %1579 = vmatmul.mubr.f32.gmra.mrb[0].mxu0 %v1444
        %v1580 = vpop.f32.mrb[0].mxu0
        %v1581 = vadd.f32 0.0, %v1580
        %v1582 = vpop.f32.mrb[0].mxu0
        %1583 = vmatprep.mubr.f32.mxu0 0.0
        %1584 = vmatmul.mubr.f32.gmra.mrb[0].mxu0 %v1447
        %v1585 = vpop.f32.mrb[0].mxu0
        %v1586 = vadd.f32 0.0, %v1585
        %v1587 = vpop.f32.mrb[0].mxu0
        %1588 = vmatprep.mubr.f32.mxu0 0.0
        %1589 = vmatmul.mubr.f32.gmra.mrb[0].mxu0 %v1450
        %v1590 = vpop.f32.mrb[0].mxu0
        %v1591 = vadd.f32 0.0, %v1590
        %v1592 = vpop.f32.mrb[0].mxu0
        %1593 = vmatprep.mubr.f32.mxu0 0.0
        %1594 = vmatmul.mubr.f32.gmra.mrb[0].mxu0 %v1453
        %v1595 = vpop.f32.mrb[0].mxu0
        %v1596 = vadd.f32 0.0, %v1595
        %v1597 = vpop.f32.mrb[0].mxu0
        %1598 = vmatprep.mubr.f32.mxu0 0.0
        %1599 = vmatmul.mubr.f32.gmra.mrb[0].mxu0 %v1456
        %v1600 = vpop.f32.mrb[0].mxu0
        %v1601 = vadd.f32 0.0, %v1600
        %v1602 = vpop.f32.mrb[0].mxu0
        %1603 = vmatprep.mubr.f32.mxu0 0.0
        %1604 = vmatmul.mubr.f32.gmra.mrb[0].mxu0 %v1459
        %v1605 = vpop.f32.mrb[0].mxu0
        %v1606 = vadd.f32 0.0, %v1605
        %v1607 = vpop.f32.mrb[0].mxu0
        %1608 = vdwg.mxu0
        %v1609 = vadd.f32 %v1379, %v1531
        %v1610 = vadd.f32 %v1380, %v1536
        %v1611 = vadd.f32 %v1381, %v1541
        %v1612 = vadd.f32 %v1382, %v1546
        %v1613 = vadd.f32 %v1383, %v1551
        %v1614 = vadd.f32 %v1384, %v1556
        %v1615 = vadd.f32 %v1385, %v1561
        %v1616 = vadd.f32 %v1386, %v1566
        %v1617 = vadd.f32 %v1387, %v1571
        %v1618 = vadd.f32 %v1388, %v1576
        %v1619 = vadd.f32 %v1389, %v1581
        %v1620 = vadd.f32 %v1390, %v1586
        %v1621 = vadd.f32 %v1391, %v1591
        %v1622 = vadd.f32 %v1392, %v1596
        %v1623 = vadd.f32 %v1393, %v1601
        %v1624 = vadd.f32 %v1394, %v1606
        %v1625 = vld [vmem:[%s203 + $0x10] sm:$0xff]
        %v1626 = vld [vmem:[%s203 + $0x18] sm:$0xff]
        %v1627 = vld [vmem:[%s203 + $0x20] sm:$0xff]
        %v1628 = vld [vmem:[%s203 + $0x28] sm:$0xff]
        %v1629 = vld [vmem:[%s203 + $0x30] sm:$0xff]
        %v1630 = vld [vmem:[%s203 + $0x38] sm:$0xff]
        %v1631 = vld [vmem:[%s203 + $0x40] sm:$0xff]
        %v1632 = vld [vmem:[%s203 + $0x48] sm:$0xff]
        %v1633 = vld [vmem:[%s203 + $0x50] sm:$0xff]
        %v1634 = vld [vmem:[%s203 + $0x58] sm:$0xff]
        %v1635 = vld [vmem:[%s203 + $0x60] sm:$0xff]
        %v1636 = vld [vmem:[%s203 + $0x68] sm:$0xff]
        %v1637 = vld [vmem:[%s203 + $0x70] sm:$0xff]
        %v1638 = vld [vmem:[%s203 + $0x78] sm:$0xff]
        %v1639 = vld [vmem:[%s203 + $0x80] sm:$0xff]
        %v1640 = vld [vmem:[%s203 + $0x88] sm:$0xff]
        %s1641 = scalar_lea.vmem [#allocation5], 24
        %v1642 = vld [vmem:[%s1641] sm:$0xf]
        %v1644 = vsel %vm258, %v1625, 0
        %v1647 = vsel %vm258, %v1626, 0
        %v1650 = vsel %vm258, %v1627, 0
        %v1653 = vsel %vm258, %v1628, 0
        %v1656 = vsel %vm258, %v1629, 0
        %v1659 = vsel %vm258, %v1630, 0
        %v1662 = vsel %vm258, %v1631, 0
        %v1665 = vsel %vm258, %v1632, 0
        %v1668 = vsel %vm258, %v1633, 0
        %v1671 = vsel %vm258, %v1634, 0
        %v1674 = vsel %vm258, %v1635, 0
        %v1677 = vsel %vm258, %v1636, 0
        %v1680 = vsel %vm258, %v1637, 0
        %v1683 = vsel %vm258, %v1638, 0
        %v1686 = vsel %vm258, %v1639, 0
        %v1689 = vsel %vm258, %v1640, 0
        %v1692 = vsel %vm307, %v1642, 0
        %1694 = vmatprep.subr.mxu0 0.0
        %1695 = vmatpush1.msra.mxu0 %v1692
        %1696 = vmatprep.subr.mxu0 0.0
        %1697 = vmatpush1.msra.mxu0 0.0
        %1698 = vmatprep.subr.mxu0 0.0
        %1699 = vmatpush1.msra.mxu0 0.0
        %1700 = vmatprep.subr.mxu0 0.0
        %1701 = vmatpush1.msra.mxu0 0.0
        %1702 = vmatprep.subr.mxu0 0.0
        %1703 = vmatpush1.msra.mxu0 0.0
        %1704 = vmatprep.subr.mxu0 0.0
        %1705 = vmatpush1.msra.mxu0 0.0
        %1706 = vmatprep.subr.mxu0 0.0
        %1707 = vmatpush1.msra.mxu0 0.0
        %1708 = vmatprep.subr.mxu0 0.0
        %1709 = vmatpush1.msra.mxu0 0.0
        %1710 = vmatprep.subr.mxu0 0.0
        %1711 = vmatpush1.msra.mxu0 0.0
        %1712 = vmatprep.subr.mxu0 0.0
        %1713 = vmatpush1.msra.mxu0 0.0
        %1714 = vmatprep.subr.mxu0 0.0
        %1715 = vmatpush1.msra.mxu0 0.0
        %1716 = vmatprep.subr.mxu0 0.0
        %1717 = vmatpush1.msra.mxu0 0.0
        %1718 = vmatprep.subr.mxu0 0.0
        %1719 = vmatpush1.msra.mxu0 0.0
        %1720 = vmatprep.subr.mxu0 0.0
        %1721 = vmatpush1.msra.mxu0 0.0
        %1722 = vmatprep.subr.mxu0 0.0
        %1723 = vmatpush1.msra.mxu0 0.0
        %1724 = vmatprep.subr.mxu0 0.0
        %1725 = vmatpush1.msra.mxu0 0.0
        %1726 = vmatprep.subr.mxu0 0.0
        %1727 = vmatpush1.msra.mxu0 0.0
        %1728 = vmatprep.subr.mxu0 0.0
        %1729 = vmatpush1.msra.mxu0 0.0
        %1730 = vmatprep.subr.mxu0 0.0
        %1731 = vmatpush1.msra.mxu0 0.0
        %1732 = vmatprep.subr.mxu0 0.0
        %1733 = vmatpush1.msra.mxu0 0.0
        %1734 = vmatprep.subr.mxu0 0.0
        %1735 = vmatpush1.msra.mxu0 0.0
        %1736 = vmatprep.subr.mxu0 0.0
        %1737 = vmatpush1.msra.mxu0 0.0
        %1738 = vmatprep.subr.mxu0 0.0
        %1739 = vmatpush1.msra.mxu0 0.0
        %1740 = vmatprep.subr.mxu0 0.0
        %1741 = vmatpush1.msra.mxu0 0.0
        %1742 = vmatprep.subr.mxu0 0.0
        %1743 = vmatpush1.msra.mxu0 0.0
        %1744 = vmatprep.subr.mxu0 0.0
        %1745 = vmatpush1.msra.mxu0 0.0
        %1746 = vmatprep.subr.mxu0 0.0
        %1747 = vmatpush1.msra.mxu0 0.0
        %1748 = vmatprep.subr.mxu0 0.0
        %1749 = vmatpush1.msra.mxu0 0.0
        %1750 = vmatprep.subr.mxu0 0.0
        %1751 = vmatpush1.msra.mxu0 0.0
        %1752 = vmatprep.subr.mxu0 0.0
        %1753 = vmatpush1.msra.mxu0 0.0
        %1754 = vmatprep.subr.mxu0 0.0
        %1755 = vmatpush1.msra.mxu0 0.0
        %1756 = vmatprep.subr.mxu0 0.0
        %1757 = vmatpush1.msra.mxu0 0.0
        %1758 = vmatprep.mubr.f32.mxu0 0.0
        %1759 = vmatmul.mubr.f32.gmra.mrb[0].mxu0 %v1644
        %v1760 = vpop.f32.mrb[0].mxu0
        %v1761 = vadd.f32 0.0, %v1760
        %v1762 = vpop.f32.mrb[0].mxu0
        %1763 = vmatprep.mubr.f32.mxu0 0.0
        %1764 = vmatmul.mubr.f32.gmra.mrb[0].mxu0 %v1647
        %v1765 = vpop.f32.mrb[0].mxu0
        %v1766 = vadd.f32 0.0, %v1765
        %v1767 = vpop.f32.mrb[0].mxu0
        %1768 = vmatprep.mubr.f32.mxu0 0.0
        %1769 = vmatmul.mubr.f32.gmra.mrb[0].mxu0 %v1650
        %v1770 = vpop.f32.mrb[0].mxu0
        %v1771 = vadd.f32 0.0, %v1770
        %v1772 = vpop.f32.mrb[0].mxu0
        %1773 = vmatprep.mubr.f32.mxu0 0.0
        %1774 = vmatmul.mubr.f32.gmra.mrb[0].mxu0 %v1653
        %v1775 = vpop.f32.mrb[0].mxu0
        %v1776 = vadd.f32 0.0, %v1775
        %v1777 = vpop.f32.mrb[0].mxu0
        %1778 = vmatprep.mubr.f32.mxu0 0.0
        %1779 = vmatmul.mubr.f32.gmra.mrb[0].mxu0 %v1656
        %v1780 = vpop.f32.mrb[0].mxu0
        %v1781 = vadd.f32 0.0, %v1780
        %v1782 = vpop.f32.mrb[0].mxu0
        %1783 = vmatprep.mubr.f32.mxu0 0.0
        %1784 = vmatmul.mubr.f32.gmra.mrb[0].mxu0 %v1659
        %v1785 = vpop.f32.mrb[0].mxu0
        %v1786 = vadd.f32 0.0, %v1785
        %v1787 = vpop.f32.mrb[0].mxu0
        %1788 = vmatprep.mubr.f32.mxu0 0.0
        %1789 = vmatmul.mubr.f32.gmra.mrb[0].mxu0 %v1662
        %v1790 = vpop.f32.mrb[0].mxu0
        %v1791 = vadd.f32 0.0, %v1790
        %v1792 = vpop.f32.mrb[0].mxu0
        %1793 = vmatprep.mubr.f32.mxu0 0.0
        %1794 = vmatmul.mubr.f32.gmra.mrb[0].mxu0 %v1665
        %v1795 = vpop.f32.mrb[0].mxu0
        %v1796 = vadd.f32 0.0, %v1795
        %v1797 = vpop.f32.mrb[0].mxu0
        %1798 = vmatprep.mubr.f32.mxu0 0.0
        %1799 = vmatmul.mubr.f32.gmra.mrb[0].mxu0 %v1668
        %v1800 = vpop.f32.mrb[0].mxu0
        %v1801 = vadd.f32 0.0, %v1800
        %v1802 = vpop.f32.mrb[0].mxu0
        %1803 = vmatprep.mubr.f32.mxu0 0.0
        %1804 = vmatmul.mubr.f32.gmra.mrb[0].mxu0 %v1671
        %v1805 = vpop.f32.mrb[0].mxu0
        %v1806 = vadd.f32 0.0, %v1805
        %v1807 = vpop.f32.mrb[0].mxu0
        %1808 = vmatprep.mubr.f32.mxu0 0.0
        %1809 = vmatmul.mubr.f32.gmra.mrb[0].mxu0 %v1674
        %v1810 = vpop.f32.mrb[0].mxu0
        %v1811 = vadd.f32 0.0, %v1810
        %v1812 = vpop.f32.mrb[0].mxu0
        %1813 = vmatprep.mubr.f32.mxu0 0.0
        %1814 = vmatmul.mubr.f32.gmra.mrb[0].mxu0 %v1677
        %v1815 = vpop.f32.mrb[0].mxu0
        %v1816 = vadd.f32 0.0, %v1815
        %v1817 = vpop.f32.mrb[0].mxu0
        %1818 = vmatprep.mubr.f32.mxu0 0.0
        %1819 = vmatmul.mubr.f32.gmra.mrb[0].mxu0 %v1680
        %v1820 = vpop.f32.mrb[0].mxu0
        %v1821 = vadd.f32 0.0, %v1820
        %v1822 = vpop.f32.mrb[0].mxu0
        %1823 = vmatprep.mubr.f32.mxu0 0.0
        %1824 = vmatmul.mubr.f32.gmra.mrb[0].mxu0 %v1683
        %v1825 = vpop.f32.mrb[0].mxu0
        %v1826 = vadd.f32 0.0, %v1825
        %v1827 = vpop.f32.mrb[0].mxu0
        %1828 = vmatprep.mubr.f32.mxu0 0.0
        %1829 = vmatmul.mubr.f32.gmra.mrb[0].mxu0 %v1686
        %v1830 = vpop.f32.mrb[0].mxu0
        %v1831 = vadd.f32 0.0, %v1830
        %v1832 = vpop.f32.mrb[0].mxu0
        %1833 = vmatprep.mubr.f32.mxu0 0.0
        %1834 = vmatmul.mubr.f32.gmra.mrb[0].mxu0 %v1689
        %v1835 = vpop.f32.mrb[0].mxu0
        %v1836 = vadd.f32 0.0, %v1835
        %v1837 = vpop.f32.mrb[0].mxu0
        %1838 = vdwg.mxu0
        %v1839 = vadd.f32 %v1609, %v1761
        %v1840 = vadd.f32 %v1610, %v1766
        %v1841 = vadd.f32 %v1611, %v1771
        %v1842 = vadd.f32 %v1612, %v1776
        %v1843 = vadd.f32 %v1613, %v1781
        %v1844 = vadd.f32 %v1614, %v1786
        %v1845 = vadd.f32 %v1615, %v1791
        %v1846 = vadd.f32 %v1616, %v1796
        %v1847 = vadd.f32 %v1617, %v1801
        %v1848 = vadd.f32 %v1618, %v1806
        %v1849 = vadd.f32 %v1619, %v1811
        %v1850 = vadd.f32 %v1620, %v1816
        %v1851 = vadd.f32 %v1621, %v1821
        %v1852 = vadd.f32 %v1622, %v1826
        %v1853 = vadd.f32 %v1623, %v1831
        %v1854 = vadd.f32 %v1624, %v1836
        %v1855 = vld [vmem:[%s472 + $0x10] sm:$0xff]
        %v1856 = vld [vmem:[%s472 + $0x18] sm:$0xff]
        %v1857 = vld [vmem:[%s472 + $0x20] sm:$0xff]
        %v1858 = vld [vmem:[%s472 + $0x28] sm:$0xff]
        %v1859 = vld [vmem:[%s472 + $0x30] sm:$0xff]
        %v1860 = vld [vmem:[%s472 + $0x38] sm:$0xff]
        %v1861 = vld [vmem:[%s472 + $0x40] sm:$0xff]
        %v1862 = vld [vmem:[%s472 + $0x48] sm:$0xff]
        %v1863 = vld [vmem:[%s472 + $0x50] sm:$0xff]
        %v1864 = vld [vmem:[%s472 + $0x58] sm:$0xff]
        %v1865 = vld [vmem:[%s472 + $0x60] sm:$0xff]
        %v1866 = vld [vmem:[%s472 + $0x68] sm:$0xff]
        %v1867 = vld [vmem:[%s472 + $0x70] sm:$0xff]
        %v1868 = vld [vmem:[%s472 + $0x78] sm:$0xff]
        %v1869 = vld [vmem:[%s472 + $0x80] sm:$0xff]
        %v1870 = vld [vmem:[%s472 + $0x88] sm:$0xff]
        %s1871 = scalar_lea.vmem [#allocation5], 28
        %v1872 = vld [vmem:[%s1871] sm:$0xf]
        %v1874 = vsel %vm258, %v1855, 0
        %v1877 = vsel %vm258, %v1856, 0
        %v1880 = vsel %vm258, %v1857, 0
        %v1883 = vsel %vm258, %v1858, 0
        %v1886 = vsel %vm258, %v1859, 0
        %v1889 = vsel %vm258, %v1860, 0
        %v1892 = vsel %vm258, %v1861, 0
        %v1895 = vsel %vm258, %v1862, 0
        %v1898 = vsel %vm258, %v1863, 0
        %v1901 = vsel %vm258, %v1864, 0
        %v1904 = vsel %vm258, %v1865, 0
        %v1907 = vsel %vm258, %v1866, 0
        %v1910 = vsel %vm258, %v1867, 0
        %v1913 = vsel %vm258, %v1868, 0
        %v1916 = vsel %vm258, %v1869, 0
        %v1919 = vsel %vm258, %v1870, 0
        %v1922 = vsel %vm307, %v1872, 0
        %1924 = vmatprep.subr.mxu0 0.0
        %1925 = vmatpush1.msra.mxu0 %v1922
        %1926 = vmatprep.subr.mxu0 0.0
        %1927 = vmatpush1.msra.mxu0 0.0
        %1928 = vmatprep.subr.mxu0 0.0
        %1929 = vmatpush1.msra.mxu0 0.0
        %1930 = vmatprep.subr.mxu0 0.0
        %1931 = vmatpush1.msra.mxu0 0.0
        %1932 = vmatprep.subr.mxu0 0.0
        %1933 = vmatpush1.msra.mxu0 0.0
        %1934 = vmatprep.subr.mxu0 0.0
        %1935 = vmatpush1.msra.mxu0 0.0
        %1936 = vmatprep.subr.mxu0 0.0
        %1937 = vmatpush1.msra.mxu0 0.0
        %1938 = vmatprep.subr.mxu0 0.0
        %1939 = vmatpush1.msra.mxu0 0.0
        %1940 = vmatprep.subr.mxu0 0.0
        %1941 = vmatpush1.msra.mxu0 0.0
        %1942 = vmatprep.subr.mxu0 0.0
        %1943 = vmatpush1.msra.mxu0 0.0
        %1944 = vmatprep.subr.mxu0 0.0
        %1945 = vmatpush1.msra.mxu0 0.0
        %1946 = vmatprep.subr.mxu0 0.0
        %1947 = vmatpush1.msra.mxu0 0.0
        %1948 = vmatprep.subr.mxu0 0.0
        %1949 = vmatpush1.msra.mxu0 0.0
        %1950 = vmatprep.subr.mxu0 0.0
        %1951 = vmatpush1.msra.mxu0 0.0
        %1952 = vmatprep.subr.mxu0 0.0
        %1953 = vmatpush1.msra.mxu0 0.0
        %1954 = vmatprep.subr.mxu0 0.0
        %1955 = vmatpush1.msra.mxu0 0.0
        %1956 = vmatprep.subr.mxu0 0.0
        %1957 = vmatpush1.msra.mxu0 0.0
        %1958 = vmatprep.subr.mxu0 0.0
        %1959 = vmatpush1.msra.mxu0 0.0
        %1960 = vmatprep.subr.mxu0 0.0
        %1961 = vmatpush1.msra.mxu0 0.0
        %1962 = vmatprep.subr.mxu0 0.0
        %1963 = vmatpush1.msra.mxu0 0.0
        %1964 = vmatprep.subr.mxu0 0.0
        %1965 = vmatpush1.msra.mxu0 0.0
        %1966 = vmatprep.subr.mxu0 0.0
        %1967 = vmatpush1.msra.mxu0 0.0
        %1968 = vmatprep.subr.mxu0 0.0
        %1969 = vmatpush1.msra.mxu0 0.0
        %1970 = vmatprep.subr.mxu0 0.0
        %1971 = vmatpush1.msra.mxu0 0.0
        %1972 = vmatprep.subr.mxu0 0.0
        %1973 = vmatpush1.msra.mxu0 0.0
        %1974 = vmatprep.subr.mxu0 0.0
        %1975 = vmatpush1.msra.mxu0 0.0
        %1976 = vmatprep.subr.mxu0 0.0
        %1977 = vmatpush1.msra.mxu0 0.0
        %1978 = vmatprep.subr.mxu0 0.0
        %1979 = vmatpush1.msra.mxu0 0.0
        %1980 = vmatprep.subr.mxu0 0.0
        %1981 = vmatpush1.msra.mxu0 0.0
        %1982 = vmatprep.subr.mxu0 0.0
        %1983 = vmatpush1.msra.mxu0 0.0
        %1984 = vmatprep.subr.mxu0 0.0
        %1985 = vmatpush1.msra.mxu0 0.0
        %1986 = vmatprep.subr.mxu0 0.0
        %1987 = vmatpush1.msra.mxu0 0.0
        %1988 = vmatprep.mubr.f32.mxu0 0.0
        %1989 = vmatmul.mubr.f32.gmra.mrb[0].mxu0 %v1874
        %v1990 = vpop.f32.mrb[0].mxu0
        %v1991 = vadd.f32 0.0, %v1990
        %v1992 = vpop.f32.mrb[0].mxu0
        %1993 = vmatprep.mubr.f32.mxu0 0.0
        %1994 = vmatmul.mubr.f32.gmra.mrb[0].mxu0 %v1877
        %v1995 = vpop.f32.mrb[0].mxu0
        %v1996 = vadd.f32 0.0, %v1995
        %v1997 = vpop.f32.mrb[0].mxu0
        %1998 = vmatprep.mubr.f32.mxu0 0.0
        %1999 = vmatmul.mubr.f32.gmra.mrb[0].mxu0 %v1880
        %v2000 = vpop.f32.mrb[0].mxu0
        %v2001 = vadd.f32 0.0, %v2000
        %v2002 = vpop.f32.mrb[0].mxu0
        %2003 = vmatprep.mubr.f32.mxu0 0.0
        %2004 = vmatmul.mubr.f32.gmra.mrb[0].mxu0 %v1883
        %v2005 = vpop.f32.mrb[0].mxu0
        %v2006 = vadd.f32 0.0, %v2005
        %v2007 = vpop.f32.mrb[0].mxu0
        %2008 = vmatprep.mubr.f32.mxu0 0.0
        %2009 = vmatmul.mubr.f32.gmra.mrb[0].mxu0 %v1886
        %v2010 = vpop.f32.mrb[0].mxu0
        %v2011 = vadd.f32 0.0, %v2010
        %v2012 = vpop.f32.mrb[0].mxu0
        %2013 = vmatprep.mubr.f32.mxu0 0.0
        %2014 = vmatmul.mubr.f32.gmra.mrb[0].mxu0 %v1889
        %v2015 = vpop.f32.mrb[0].mxu0
        %v2016 = vadd.f32 0.0, %v2015
        %v2017 = vpop.f32.mrb[0].mxu0
        %2018 = vmatprep.mubr.f32.mxu0 0.0
        %2019 = vmatmul.mubr.f32.gmra.mrb[0].mxu0 %v1892
        %v2020 = vpop.f32.mrb[0].mxu0
        %v2021 = vadd.f32 0.0, %v2020
        %v2022 = vpop.f32.mrb[0].mxu0
        %2023 = vmatprep.mubr.f32.mxu0 0.0
        %2024 = vmatmul.mubr.f32.gmra.mrb[0].mxu0 %v1895
        %v2025 = vpop.f32.mrb[0].mxu0
        %v2026 = vadd.f32 0.0, %v2025
        %v2027 = vpop.f32.mrb[0].mxu0
        %2028 = vmatprep.mubr.f32.mxu0 0.0
        %2029 = vmatmul.mubr.f32.gmra.mrb[0].mxu0 %v1898
        %v2030 = vpop.f32.mrb[0].mxu0
        %v2031 = vadd.f32 0.0, %v2030
        %v2032 = vpop.f32.mrb[0].mxu0
        %2033 = vmatprep.mubr.f32.mxu0 0.0
        %2034 = vmatmul.mubr.f32.gmra.mrb[0].mxu0 %v1901
        %v2035 = vpop.f32.mrb[0].mxu0
        %v2036 = vadd.f32 0.0, %v2035
        %v2037 = vpop.f32.mrb[0].mxu0
        %2038 = vmatprep.mubr.f32.mxu0 0.0
        %2039 = vmatmul.mubr.f32.gmra.mrb[0].mxu0 %v1904
        %v2040 = vpop.f32.mrb[0].mxu0
        %v2041 = vadd.f32 0.0, %v2040
        %v2042 = vpop.f32.mrb[0].mxu0
        %2043 = vmatprep.mubr.f32.mxu0 0.0
        %2044 = vmatmul.mubr.f32.gmra.mrb[0].mxu0 %v1907
        %v2045 = vpop.f32.mrb[0].mxu0
        %v2046 = vadd.f32 0.0, %v2045
        %v2047 = vpop.f32.mrb[0].mxu0
        %2048 = vmatprep.mubr.f32.mxu0 0.0
        %2049 = vmatmul.mubr.f32.gmra.mrb[0].mxu0 %v1910
        %v2050 = vpop.f32.mrb[0].mxu0
        %v2051 = vadd.f32 0.0, %v2050
        %v2052 = vpop.f32.mrb[0].mxu0
        %2053 = vmatprep.mubr.f32.mxu0 0.0
        %2054 = vmatmul.mubr.f32.gmra.mrb[0].mxu0 %v1913
        %v2055 = vpop.f32.mrb[0].mxu0
        %v2056 = vadd.f32 0.0, %v2055
        %v2057 = vpop.f32.mrb[0].mxu0
        %2058 = vmatprep.mubr.f32.mxu0 0.0
        %2059 = vmatmul.mubr.f32.gmra.mrb[0].mxu0 %v1916
        %v2060 = vpop.f32.mrb[0].mxu0
        %v2061 = vadd.f32 0.0, %v2060
        %v2062 = vpop.f32.mrb[0].mxu0
        %2063 = vmatprep.mubr.f32.mxu0 0.0
        %2064 = vmatmul.mubr.f32.gmra.mrb[0].mxu0 %v1919
        %v2065 = vpop.f32.mrb[0].mxu0
        %v2066 = vadd.f32 0.0, %v2065
        %v2067 = vpop.f32.mrb[0].mxu0
        %2068 = vdwg.mxu0
        %v2069 = vadd.f32 %v1839, %v1991
        %v2070 = vadd.f32 %v1840, %v1996
        %v2071 = vadd.f32 %v1841, %v2001
        %v2072 = vadd.f32 %v1842, %v2006
        %v2073 = vadd.f32 %v1843, %v2011
        %v2074 = vadd.f32 %v1844, %v2016
        %v2075 = vadd.f32 %v1845, %v2021
        %v2076 = vadd.f32 %v1846, %v2026
        %v2077 = vadd.f32 %v1847, %v2031
        %v2078 = vadd.f32 %v1848, %v2036
        %v2079 = vadd.f32 %v1849, %v2041
        %v2080 = vadd.f32 %v1850, %v2046
        %v2081 = vadd.f32 %v1851, %v2051
        %v2082 = vadd.f32 %v1852, %v2056
        %v2083 = vadd.f32 %v1853, %v2061
        %v2084 = vadd.f32 %v1854, %v2066
        %v2085 = vld [vmem:[%s203 + $0x11] sm:$0xff]
        %v2086 = vld [vmem:[%s203 + $0x19] sm:$0xff]
        %v2087 = vld [vmem:[%s203 + $0x21] sm:$0xff]
        %v2088 = vld [vmem:[%s203 + $0x29] sm:$0xff]
        %v2089 = vld [vmem:[%s203 + $0x31] sm:$0xff]
        %v2090 = vld [vmem:[%s203 + $0x39] sm:$0xff]
        %v2091 = vld [vmem:[%s203 + $0x41] sm:$0xff]
        %v2092 = vld [vmem:[%s203 + $0x49] sm:$0xff]
        %v2093 = vld [vmem:[%s203 + $0x51] sm:$0xff]
        %v2094 = vld [vmem:[%s203 + $0x59] sm:$0xff]
        %v2095 = vld [vmem:[%s203 + $0x61] sm:$0xff]
        %v2096 = vld [vmem:[%s203 + $0x69] sm:$0xff]
        %v2097 = vld [vmem:[%s203 + $0x71] sm:$0xff]
        %v2098 = vld [vmem:[%s203 + $0x79] sm:$0xff]
        %v2099 = vld [vmem:[%s203 + $0x81] sm:$0xff]
        %v2100 = vld [vmem:[%s203 + $0x89] sm:$0xff]
        %s2101 = scalar_lea.vmem [#allocation5], 32
        %v2102 = vld [vmem:[%s2101] sm:$0xf]
        %v2104 = vsel %vm258, %v2085, 0
        %v2107 = vsel %vm258, %v2086, 0
        %v2110 = vsel %vm258, %v2087, 0
        %v2113 = vsel %vm258, %v2088, 0
        %v2116 = vsel %vm258, %v2089, 0
        %v2119 = vsel %vm258, %v2090, 0
        %v2122 = vsel %vm258, %v2091, 0
        %v2125 = vsel %vm258, %v2092, 0
        %v2128 = vsel %vm258, %v2093, 0
        %v2131 = vsel %vm258, %v2094, 0
        %v2134 = vsel %vm258, %v2095, 0
        %v2137 = vsel %vm258, %v2096, 0
        %v2140 = vsel %vm258, %v2097, 0
        %v2143 = vsel %vm258, %v2098, 0
        %v2146 = vsel %vm258, %v2099, 0
        %v2149 = vsel %vm258, %v2100, 0
        %v2152 = vsel %vm307, %v2102, 0
        %2154 = vmatprep.subr.mxu0 0.0
        %2155 = vmatpush1.msra.mxu0 %v2152
        %2156 = vmatprep.subr.mxu0 0.0
        %2157 = vmatpush1.msra.mxu0 0.0
        %2158 = vmatprep.subr.mxu0 0.0
        %2159 = vmatpush1.msra.mxu0 0.0
        %2160 = vmatprep.subr.mxu0 0.0
        %2161 = vmatpush1.msra.mxu0 0.0
        %2162 = vmatprep.subr.mxu0 0.0
        %2163 = vmatpush1.msra.mxu0 0.0
        %2164 = vmatprep.subr.mxu0 0.0
        %2165 = vmatpush1.msra.mxu0 0.0
        %2166 = vmatprep.subr.mxu0 0.0
        %2167 = vmatpush1.msra.mxu0 0.0
        %2168 = vmatprep.subr.mxu0 0.0
        %2169 = vmatpush1.msra.mxu0 0.0
        %2170 = vmatprep.subr.mxu0 0.0
        %2171 = vmatpush1.msra.mxu0 0.0
        %2172 = vmatprep.subr.mxu0 0.0
        %2173 = vmatpush1.msra.mxu0 0.0
        %2174 = vmatprep.subr.mxu0 0.0
        %2175 = vmatpush1.msra.mxu0 0.0
        %2176 = vmatprep.subr.mxu0 0.0
        %2177 = vmatpush1.msra.mxu0 0.0
        %2178 = vmatprep.subr.mxu0 0.0
        %2179 = vmatpush1.msra.mxu0 0.0
        %2180 = vmatprep.subr.mxu0 0.0
        %2181 = vmatpush1.msra.mxu0 0.0
        %2182 = vmatprep.subr.mxu0 0.0
        %2183 = vmatpush1.msra.mxu0 0.0
        %2184 = vmatprep.subr.mxu0 0.0
        %2185 = vmatpush1.msra.mxu0 0.0
        %2186 = vmatprep.subr.mxu0 0.0
        %2187 = vmatpush1.msra.mxu0 0.0
        %2188 = vmatprep.subr.mxu0 0.0
        %2189 = vmatpush1.msra.mxu0 0.0
        %2190 = vmatprep.subr.mxu0 0.0
        %2191 = vmatpush1.msra.mxu0 0.0
        %2192 = vmatprep.subr.mxu0 0.0
        %2193 = vmatpush1.msra.mxu0 0.0
        %2194 = vmatprep.subr.mxu0 0.0
        %2195 = vmatpush1.msra.mxu0 0.0
        %2196 = vmatprep.subr.mxu0 0.0
        %2197 = vmatpush1.msra.mxu0 0.0
        %2198 = vmatprep.subr.mxu0 0.0
        %2199 = vmatpush1.msra.mxu0 0.0
        %2200 = vmatprep.subr.mxu0 0.0
        %2201 = vmatpush1.msra.mxu0 0.0
        %2202 = vmatprep.subr.mxu0 0.0
        %2203 = vmatpush1.msra.mxu0 0.0
        %2204 = vmatprep.subr.mxu0 0.0
        %2205 = vmatpush1.msra.mxu0 0.0
        %2206 = vmatprep.subr.mxu0 0.0
        %2207 = vmatpush1.msra.mxu0 0.0
        %2208 = vmatprep.subr.mxu0 0.0
        %2209 = vmatpush1.msra.mxu0 0.0
        %2210 = vmatprep.subr.mxu0 0.0
        %2211 = vmatpush1.msra.mxu0 0.0
        %2212 = vmatprep.subr.mxu0 0.0
        %2213 = vmatpush1.msra.mxu0 0.0
        %2214 = vmatprep.subr.mxu0 0.0
        %2215 = vmatpush1.msra.mxu0 0.0
        %2216 = vmatprep.subr.mxu0 0.0
        %2217 = vmatpush1.msra.mxu0 0.0
        %2218 = vmatprep.mubr.f32.mxu0 0.0
        %2219 = vmatmul.mubr.f32.gmra.mrb[0].mxu0 %v2104
        %v2220 = vpop.f32.mrb[0].mxu0
        %v2221 = vadd.f32 0.0, %v2220
        %v2222 = vpop.f32.mrb[0].mxu0
        %2223 = vmatprep.mubr.f32.mxu0 0.0
        %2224 = vmatmul.mubr.f32.gmra.mrb[0].mxu0 %v2107
        %v2225 = vpop.f32.mrb[0].mxu0
        %v2226 = vadd.f32 0.0, %v2225
        %v2227 = vpop.f32.mrb[0].mxu0
        %2228 = vmatprep.mubr.f32.mxu0 0.0
        %2229 = vmatmul.mubr.f32.gmra.mrb[0].mxu0 %v2110
        %v2230 = vpop.f32.mrb[0].mxu0
        %v2231 = vadd.f32 0.0, %v2230
        %v2232 = vpop.f32.mrb[0].mxu0
        %2233 = vmatprep.mubr.f32.mxu0 0.0
        %2234 = vmatmul.mubr.f32.gmra.mrb[0].mxu0 %v2113
        %v2235 = vpop.f32.mrb[0].mxu0
        %v2236 = vadd.f32 0.0, %v2235
        %v2237 = vpop.f32.mrb[0].mxu0
        %2238 = vmatprep.mubr.f32.mxu0 0.0
        %2239 = vmatmul.mubr.f32.gmra.mrb[0].mxu0 %v2116
        %v2240 = vpop.f32.mrb[0].mxu0
        %v2241 = vadd.f32 0.0, %v2240
        %v2242 = vpop.f32.mrb[0].mxu0
        %2243 = vmatprep.mubr.f32.mxu0 0.0
        %2244 = vmatmul.mubr.f32.gmra.mrb[0].mxu0 %v2119
        %v2245 = vpop.f32.mrb[0].mxu0
        %v2246 = vadd.f32 0.0, %v2245
        %v2247 = vpop.f32.mrb[0].mxu0
        %2248 = vmatprep.mubr.f32.mxu0 0.0
        %2249 = vmatmul.mubr.f32.gmra.mrb[0].mxu0 %v2122
        %v2250 = vpop.f32.mrb[0].mxu0
        %v2251 = vadd.f32 0.0, %v2250
        %v2252 = vpop.f32.mrb[0].mxu0
        %2253 = vmatprep.mubr.f32.mxu0 0.0
        %2254 = vmatmul.mubr.f32.gmra.mrb[0].mxu0 %v2125
        %v2255 = vpop.f32.mrb[0].mxu0
        %v2256 = vadd.f32 0.0, %v2255
        %v2257 = vpop.f32.mrb[0].mxu0
        %2258 = vmatprep.mubr.f32.mxu0 0.0
        %2259 = vmatmul.mubr.f32.gmra.mrb[0].mxu0 %v2128
        %v2260 = vpop.f32.mrb[0].mxu0
        %v2261 = vadd.f32 0.0, %v2260
        %v2262 = vpop.f32.mrb[0].mxu0
        %2263 = vmatprep.mubr.f32.mxu0 0.0
        %2264 = vmatmul.mubr.f32.gmra.mrb[0].mxu0 %v2131
        %v2265 = vpop.f32.mrb[0].mxu0
        %v2266 = vadd.f32 0.0, %v2265
        %v2267 = vpop.f32.mrb[0].mxu0
        %2268 = vmatprep.mubr.f32.mxu0 0.0
        %2269 = vmatmul.mubr.f32.gmra.mrb[0].mxu0 %v2134
        %v2270 = vpop.f32.mrb[0].mxu0
        %v2271 = vadd.f32 0.0, %v2270
        %v2272 = vpop.f32.mrb[0].mxu0
        %2273 = vmatprep.mubr.f32.mxu0 0.0
        %2274 = vmatmul.mubr.f32.gmra.mrb[0].mxu0 %v2137
        %v2275 = vpop.f32.mrb[0].mxu0
        %v2276 = vadd.f32 0.0, %v2275
        %v2277 = vpop.f32.mrb[0].mxu0
        %2278 = vmatprep.mubr.f32.mxu0 0.0
        %2279 = vmatmul.mubr.f32.gmra.mrb[0].mxu0 %v2140
        %v2280 = vpop.f32.mrb[0].mxu0
        %v2281 = vadd.f32 0.0, %v2280
        %v2282 = vpop.f32.mrb[0].mxu0
        %2283 = vmatprep.mubr.f32.mxu0 0.0
        %2284 = vmatmul.mubr.f32.gmra.mrb[0].mxu0 %v2143
        %v2285 = vpop.f32.mrb[0].mxu0
        %v2286 = vadd.f32 0.0, %v2285
        %v2287 = vpop.f32.mrb[0].mxu0
        %2288 = vmatprep.mubr.f32.mxu0 0.0
        %2289 = vmatmul.mubr.f32.gmra.mrb[0].mxu0 %v2146
        %v2290 = vpop.f32.mrb[0].mxu0
        %v2291 = vadd.f32 0.0, %v2290
        %v2292 = vpop.f32.mrb[0].mxu0
        %2293 = vmatprep.mubr.f32.mxu0 0.0
        %2294 = vmatmul.mubr.f32.gmra.mrb[0].mxu0 %v2149
        %v2295 = vpop.f32.mrb[0].mxu0
        %v2296 = vadd.f32 0.0, %v2295
        %v2297 = vpop.f32.mrb[0].mxu0
        %2298 = vdwg.mxu0
        %v2299 = vadd.f32 %v2069, %v2221
        %v2300 = vadd.f32 %v2070, %v2226
        %v2301 = vadd.f32 %v2071, %v2231
        %v2302 = vadd.f32 %v2072, %v2236
        %v2303 = vadd.f32 %v2073, %v2241
        %v2304 = vadd.f32 %v2074, %v2246
        %v2305 = vadd.f32 %v2075, %v2251
        %v2306 = vadd.f32 %v2076, %v2256
        %v2307 = vadd.f32 %v2077, %v2261
        %v2308 = vadd.f32 %v2078, %v2266
        %v2309 = vadd.f32 %v2079, %v2271
        %v2310 = vadd.f32 %v2080, %v2276
        %v2311 = vadd.f32 %v2081, %v2281
        %v2312 = vadd.f32 %v2082, %v2286
        %v2313 = vadd.f32 %v2083, %v2291
        %v2314 = vadd.f32 %v2084, %v2296
        %2315 = vst [vmem:[%s233] sm:$0xff] %v2299
        %2316 = vst [vmem:[%s233 + $0x8] sm:$0xff] %v2300
        %2317 = vst [vmem:[%s233 + $0x10] sm:$0xff] %v2301
        %2318 = vst [vmem:[%s233 + $0x18] sm:$0xff] %v2302
        %2319 = vst [vmem:[%s233 + $0x20] sm:$0xff] %v2303
        %2320 = vst [vmem:[%s233 + $0x28] sm:$0xff] %v2304
        %2321 = vst [vmem:[%s233 + $0x30] sm:$0xff] %v2305
        %2322 = vst [vmem:[%s233 + $0x38] sm:$0xff] %v2306
        %2323 = vst [vmem:[%s233 + $0x40] sm:$0xff] %v2307
        %2324 = vst [vmem:[%s233 + $0x48] sm:$0xff] %v2308
        %2325 = vst [vmem:[%s233 + $0x50] sm:$0xff] %v2309
        %2326 = vst [vmem:[%s233 + $0x58] sm:$0xff] %v2310
        %2327 = vst [vmem:[%s233 + $0x60] sm:$0xff] %v2311
        %2328 = vst [vmem:[%s233 + $0x68] sm:$0xff] %v2312
        %2329 = vst [vmem:[%s233 + $0x70] sm:$0xff] %v2313
        %2330 = vst [vmem:[%s233 + $0x78] sm:$0xff] %v2314
        %s2331 = sand.u32 %s113, 1
        %s2332 = scalar_lea.sflag [#allocation4], %s2331
        %s2333 = sand.u32 %s113, 1
        %s2334 = smul.addr %s2333, 128
        %s2335 = scalar_lea.vmem [#allocation8], %s2334
        // Predicated region
        $region45: #{downsample_avg_conv.1} parent=31 // pred_check
          %p2336 = pneg %p123
        $region46: #{downsample_avg_conv.1} parent=31 // pred_check_branch
          %2338 = sbr.rel (%p2336) target = $region48
        $region47: #{downsample_avg_conv.1} parent=31 // pred_region
          %s2340 = ssub.s32 2048, 2048
          %2341 = vsyncadd %s2332, %s2340
          %s2342 = smul.addr %s26, 16
          %s2343 = smul.addr %s25, 16
          %s2344 = sadd.s32 %s2342, %s2343
          %s2345 = smul.addr %s2344, 128
          %s2346 = scalar_lea.hbm %s3, %s2345
          %s2347 = sshll.u32 %s2335, 4
          %s2348 = int_to_ptr.vmem [resolvable:$true] %s2347
          %2353 = dma.vmem_to_hbm [thread:$0]  %s2348, 2048, %s2346, %s2332, 128, 128, 8
        $region48: #{downsample_avg_conv.1} parent=31 // pred_fallthru
          _
      $region32: #{downsample_avg_conv.1} parent=5 // pred_fallthru
        _
      %p2354 = scmp.le.s32.totalorder 2, %s16
      // Predicated region
      $region49: #{downsample_avg_conv.1} parent=5 // pred_check
        %p2355 = pneg %p2354
      $region50: #{downsample_avg_conv.1} parent=5 // pred_check_branch
        %2357 = sbr.rel (%p2355) target = $region52
      $region51: #{downsample_avg_conv.1} parent=5 // pred_region
        %s2358 = ssub.s32 %s16, 2
        // Predicated region
        $region53: #{downsample_avg_conv.1} parent=51 // pred_check
          %p2359 = pneg %p129
        $region54: #{downsample_avg_conv.1} parent=51 // pred_check_branch
          %2361 = sbr.rel (%p2359) target = $region56
        $region55: #{downsample_avg_conv.1} parent=51 // pred_region
          %s2362 = sand.u32 %s114, 1
          %s2363 = scalar_lea.sflag [#allocation4], %s2362
          %s2364 = sand.u32 %s114, 1
          %s2365 = smul.addr %s2364, 128
          %s2366 = scalar_lea.vmem [#allocation8], %s2365
          %2367 = dma.done %s2363, 2048
        $region56: #{downsample_avg_conv.1} parent=51 // pred_fallthru
          _
      $region52: #{downsample_avg_conv.1} parent=5 // pred_fallthru
        _
    $region6: #{downsample_avg_conv.1} parent=1 // loop_footer
      %s20 = sadd.s32 1, %s16
    $region7: #{downsample_avg_conv.1} parent=1 // loop_footer_branch
      %15 = sbr.rel target = $region3
    $region8: #{downsample_avg_conv.1} parent=1 // loop_exit
      _
    %2368 = vsyncpa [#allocation3], 1
    %s2369 = scalar_lea.sflag [#allocation3], 1
    %2370 = vsyncpa %s2369, 1
    %2371 = vsyncpa [#allocation6], 1
    %2372 = vsyncpa [#allocation4], 1
    %s2373 = scalar_lea.sflag [#allocation4], 1
    %2374 = vsyncpa %s2373, 1

</llo_original>
